<compile_context>
chip_gen: v7x
topology: tpu7x:2x2x1
jax: 0.10.0
libtpu: 0.0.40
codegen_flags: <defaults>
</compile_context>

<pallas_src>
import functools
import math

import jax
import jax.numpy as jnp
from jax.experimental import pallas as pl
from jax.experimental.pallas import tpu as pltpu


LANE = 128            # lane width (last-dim tile)
SUBLANE_F32 = 8       # f32 sublane height
_M_TILE = 256         # M tile used when batch is large enough to shard
_M_TILE_THRESHOLD = 256


def _round_up(x, m):
    return ((x + m - 1) // m) * m


# ----------------------------- Pallas kernel --------------------------------

def _fused_mlp_kernel(*refs, num_layers):
    """refs = (x_ref, w0_ref, b0_ref, ..., w_{L-1}_ref, b_{L-1}_ref, o_ref).

    Chains y = relu(x @ W_i + b_i) for all but the last layer, then
    y = x @ W_last + b_last.  All intermediates stay in VMEM/vregs.
    """
    x_ref = refs[0]
    o_ref = refs[-1]
    wb_refs = refs[1:-1]

    h = x_ref[...]                          # bf16 [TM, K]
    for i in range(num_layers):
        w = wb_refs[2 * i][...]             # bf16 [K_i, N_i]
        b = wb_refs[2 * i + 1][...]         # f32  [1,  N_i]
        # bf16 x bf16 on the MXU, f32 accumulate.
        y = jnp.dot(h.astype(w.dtype), w, preferred_element_type=jnp.float32)
        y = y + b                           # f32 epilogue (broadcast over rows)
        if i != num_layers - 1:
            y = jnp.maximum(y, 0.0)         # ReLU on hidden layers only
        h = y
    o_ref[...] = h.astype(o_ref.dtype)


# ----------------------------- Params / wrapper ------------------------------

def init_simple_mlp_params(key, input_size, hidden_size, output_size,
                           num_hidden_layers, weight_dtype=jnp.bfloat16):
    """Gaussian N(0, 1/sqrt(fan_in)) weights, zero biases.

    Weights stored as (in_features, out_features) in bf16; biases as (1, out)
    f32.  The LAST layer is lane-padded (out -> multiple of 128) here, at init
    time, so the per-call forward pays zero padding traffic.
    """
    sizes = ([input_size] + [hidden_size] * (num_hidden_layers + 1)
             + [output_size])
    n_layers = len(sizes) - 1
    params = []
    for li, (fan_in, fan_out) in enumerate(zip(sizes[:-1], sizes[1:])):
        key, wk = jax.random.split(key)
        std = 1.0 / math.sqrt(fan_in)
        w = jax.random.normal(wk, (fan_in, fan_out), dtype=jnp.float32) * std
        b = jnp.zeros((fan_out,), dtype=jnp.float32)
        if li == n_layers - 1:
            n_pad = max(LANE, _round_up(fan_out, LANE))
            if n_pad != fan_out:
                w = jnp.pad(w, ((0, 0), (0, n_pad - fan_out)))
                b = jnp.pad(b, ((0, n_pad - fan_out),))
        params.append((w.astype(weight_dtype), b.reshape(1, -1)))
    return params


def simple_mlp_forward(params, x, output_size):
    """Replicates SimpleMLP.forward: flatten, hidden layers with ReLU, final
    layer without activation.  One fused Pallas kernel for all layers."""
    B = x.shape[0]
    # Flatten + cast once in the wrapper: bf16 activations halve first-layer
    # DMA bytes; f32 accumulation happens inside the kernel.
    xf = x.reshape(B, -1).astype(jnp.bfloat16)      # x.view(x.size(0), -1)
    K = xf.shape[1]
    n_layers = len(params)
    N_pad = params[-1][0].shape[1]                  # lane-padded at init

    # ---- batch padding / tiling --------------------------------------------
    M8 = max(SUBLANE_F32, _round_up(B, SUBLANE_F32))
    if M8 >= _M_TILE_THRESHOLD:
        tm = _M_TILE
        M_pad = _round_up(B, tm)
        grid = (M_pad // tm,)
        semantics = ("parallel",)   # shards across v7x's two TensorCores
        resident = False
    else:
        tm = M8
        M_pad = M8
        grid = (1,)
        semantics = ("arbitrary",)
        resident = True
    if M_pad != B:
        xf = jnp.pad(xf, ((0, M_pad - B), (0, 0)))

    # ---- BlockSpecs ----------------------------------------------------------
    # grid==1: nothing to prefetch -> single-buffer everything (halves VMEM).
    # grid>1 : weights/biases are grid-invariant -> single-buffer them; x/out
    #          keep default double buffering so DMAs overlap the MXU.
    single = pl.Buffered(1)
    if resident:
        x_spec = pl.BlockSpec((tm, K), lambda i: (0, 0), pipeline_mode=single)
        out_spec = pl.BlockSpec((tm, N_pad), lambda i: (0, 0),
                                pipeline_mode=single)
    else:
        x_spec = pl.BlockSpec((tm, K), lambda i: (i, 0))
        out_spec = pl.BlockSpec((tm, N_pad), lambda i: (i, 0))

    flat_args = [xf]
    in_specs = [x_spec]
    for (w, b) in params:
        k_in, n_o = w.shape
        flat_args += [w, b]
        in_specs += [
            pl.BlockSpec((k_in, n_o), lambda i: (0, 0), pipeline_mode=single),
            pl.BlockSpec((1, n_o), lambda i: (0, 0), pipeline_mode=single),
        ]

    # ---- explicit VMEM budget (mainly protects v5e's 16-MiB default scoped
    # limit when hidden_size grows); tiny shapes land on the 32-MiB floor. ----
    buf_bytes = xf.size * xf.dtype.itemsize + M_pad * N_pad * 4
    for (w, b) in params:
        buf_bytes += w.size * w.dtype.itemsize + b.size * b.dtype.itemsize
    vmem_limit = int(min(96 << 20, max(32 << 20, 2 * buf_bytes + (4 << 20))))

    out_padded = pl.pallas_call(
        functools.partial(_fused_mlp_kernel, num_layers=n_layers),
        out_shape=jax.ShapeDtypeStruct((M_pad, N_pad), jnp.float32),
        grid=grid,
        in_specs=in_specs,
        out_specs=out_spec,
        compiler_params=pltpu.CompilerParams(
            dimension_semantics=semantics,
            vmem_limit_bytes=vmem_limit),
    )(*flat_args)

    return out_padded[:B, :output_size]


# ----------------------------------- Main ------------------------------------

if __name__ == "__main__":
    # Small, module-consistent shapes: NCHW image input flattened to 1024.
    batch, channels, spatial = 2, 4, 16
    input_size = channels * spatial * spatial   # 1024
    hidden_size = 256
    output_size = 10
    num_hidden_layers = 2

    key = jax.random.PRNGKey(0)
    key, xk = jax.random.split(key)
    x = jax.random.normal(xk, (batch, channels, spatial, spatial),
                          dtype=jnp.float32)

    params = init_simple_mlp_params(key, input_size, hidden_size,
                                    output_size, num_hidden_layers)

    out = simple_mlp_forward(params, x, output_size)
    out = jax.block_until_ready(out)
    assert out.shape == (batch, output_size)

    # Reference 1: plain-JAX math on the same bf16-weight / bf16-activation,
    # f32-accumulate path the kernel uses (tight check of the kernel itself).
    h = x.reshape(batch, -1)
    for i, (w, b) in enumerate(params):
        h = jnp.dot(h.astype(jnp.bfloat16), w,
                    preferred_element_type=jnp.float32) + b
        if i != len(params) - 1:
            h = jnp.maximum(h, 0.0)
    ref1 = h[:, :output_size]
    assert jnp.allclose(out, ref1, atol=5e-3, rtol=5e-3), \
        float(jnp.max(jnp.abs(out - ref1)))

    # Reference 2: full-f32 math (PyTorch-equivalent semantics); loose
    # tolerance accounts for bf16 weight/activation quantization.
    hf = x.reshape(batch, -1)
    for i, (w, b) in enumerate(params):
        hf = hf @ w.astype(jnp.float32) + b
        if i != len(params) - 1:
            hf = jnp.maximum(hf, 0.0)
    ref2 = hf[:, :output_size]
    assert jnp.allclose(out, ref2, atol=5e-2, rtol=5e-2), \
        float(jnp.max(jnp.abs(out - ref2)))

    print("KERNEL_OK")
</pallas_src>

<mosaic_0001>
module attributes {stable_mosaic.version = 11 : i64} {
  func.func @_fused_mlp_kernel(%arg0: i32, %arg1: memref<8x1024xbf16, #tpu.memory_space<vmem>>, %arg2: memref<1024x256xbf16, #tpu.memory_space<vmem>>, %arg3: memref<1x256xf32, #tpu.memory_space<vmem>>, %arg4: memref<256x256xbf16, #tpu.memory_space<vmem>>, %arg5: memref<1x256xf32, #tpu.memory_space<vmem>>, %arg6: memref<256x256xbf16, #tpu.memory_space<vmem>>, %arg7: memref<1x256xf32, #tpu.memory_space<vmem>>, %arg8: memref<256x128xbf16, #tpu.memory_space<vmem>>, %arg9: memref<1x128xf32, #tpu.memory_space<vmem>>, %arg10: memref<8x128xf32, #tpu.memory_space<vmem>>) attributes {dimension_semantics = [#tpu.dimension_semantics<arbitrary>], iteration_bounds = array<i64: 1>, scalar_prefetch = 0 : i64, scratch_operands = 0 : i64, tpu.core_type = #tpu.core_type<tc>, window_params = [{pipeline_mode = #tpu.pipeline_mode<synchronous>, transform_indices = @transform_0, window_bounds = array<i64: 8, 1024>}, {pipeline_mode = #tpu.pipeline_mode<synchronous>, transform_indices = @transform_1, window_bounds = array<i64: 1024, 256>}, {pipeline_mode = #tpu.pipeline_mode<synchronous>, transform_indices = @transform_2, window_bounds = array<i64: 1, 256>}, {pipeline_mode = #tpu.pipeline_mode<synchronous>, transform_indices = @transform_3, window_bounds = array<i64: 256, 256>}, {pipeline_mode = #tpu.pipeline_mode<synchronous>, transform_indices = @transform_4, window_bounds = array<i64: 1, 256>}, {pipeline_mode = #tpu.pipeline_mode<synchronous>, transform_indices = @transform_5, window_bounds = array<i64: 256, 256>}, {pipeline_mode = #tpu.pipeline_mode<synchronous>, transform_indices = @transform_6, window_bounds = array<i64: 1, 256>}, {pipeline_mode = #tpu.pipeline_mode<synchronous>, transform_indices = @transform_7, window_bounds = array<i64: 256, 128>}, {pipeline_mode = #tpu.pipeline_mode<synchronous>, transform_indices = @transform_8, window_bounds = array<i64: 1, 128>}, {pipeline_mode = #tpu.pipeline_mode<synchronous>, transform_indices = @transform_9, window_bounds = array<i64: 8, 128>}]} {
    %c0 = arith.constant 0 : index
    %c0_0 = arith.constant 0 : index
    %0 = vector.load %arg1[%c0, %c0_0] : memref<8x1024xbf16, #tpu.memory_space<vmem>>, vector<8x1024xbf16>
    %c0_1 = arith.constant 0 : index
    %c0_2 = arith.constant 0 : index
    %1 = vector.load %arg2[%c0_1, %c0_2] : memref<1024x256xbf16, #tpu.memory_space<vmem>>, vector<1024x256xbf16>
    %c0_3 = arith.constant 0 : index
    %c0_4 = arith.constant 0 : index
    %2 = vector.load %arg3[%c0_3, %c0_4] : memref<1x256xf32, #tpu.memory_space<vmem>>, vector<1x256xf32>
    %cst = arith.constant dense<0.000000e+00> : vector<8x256xf32>
    %3 = tpu.matmul %0, %1, %cst {dimension_numbers = #tpu.dot_dimension_numbers<[1], [0], [0], [1], [0, 0, 1, 1], [], []>} : vector<8x1024xbf16>, vector<1024x256xbf16>, vector<8x256xf32> -> vector<8x256xf32>
    %4 = vector.broadcast %2 : vector<1x256xf32> to vector<8x256xf32>
    %5 = arith.addf %3, %4 : vector<8x256xf32>
    %cst_5 = arith.constant 0.000000e+00 : f32
    %6 = vector.broadcast %cst_5 : f32 to vector<8x256xf32>
    %7 = arith.maximumf %5, %6 : vector<8x256xf32>
    %c0_6 = arith.constant 0 : index
    %c0_7 = arith.constant 0 : index
    %8 = vector.load %arg4[%c0_6, %c0_7] : memref<256x256xbf16, #tpu.memory_space<vmem>>, vector<256x256xbf16>
    %c0_8 = arith.constant 0 : index
    %c0_9 = arith.constant 0 : index
    %9 = vector.load %arg5[%c0_8, %c0_9] : memref<1x256xf32, #tpu.memory_space<vmem>>, vector<1x256xf32>
    %10 = arith.truncf %7 : vector<8x256xf32> to vector<8x256xbf16>
    %cst_10 = arith.constant dense<0.000000e+00> : vector<8x256xf32>
    %11 = tpu.matmul %10, %8, %cst_10 {dimension_numbers = #tpu.dot_dimension_numbers<[1], [0], [0], [1], [0, 0, 1, 1], [], []>} : vector<8x256xbf16>, vector<256x256xbf16>, vector<8x256xf32> -> vector<8x256xf32>
    %12 = vector.broadcast %9 : vector<1x256xf32> to vector<8x256xf32>
    %13 = arith.addf %11, %12 : vector<8x256xf32>
    %cst_11 = arith.constant 0.000000e+00 : f32
    %14 = vector.broadcast %cst_11 : f32 to vector<8x256xf32>
    %15 = arith.maximumf %13, %14 : vector<8x256xf32>
    %c0_12 = arith.constant 0 : index
    %c0_13 = arith.constant 0 : index
    %16 = vector.load %arg6[%c0_12, %c0_13] : memref<256x256xbf16, #tpu.memory_space<vmem>>, vector<256x256xbf16>
    %c0_14 = arith.constant 0 : index
    %c0_15 = arith.constant 0 : index
    %17 = vector.load %arg7[%c0_14, %c0_15] : memref<1x256xf32, #tpu.memory_space<vmem>>, vector<1x256xf32>
    %18 = arith.truncf %15 : vector<8x256xf32> to vector<8x256xbf16>
    %cst_16 = arith.constant dense<0.000000e+00> : vector<8x256xf32>
    %19 = tpu.matmul %18, %16, %cst_16 {dimension_numbers = #tpu.dot_dimension_numbers<[1], [0], [0], [1], [0, 0, 1, 1], [], []>} : vector<8x256xbf16>, vector<256x256xbf16>, vector<8x256xf32> -> vector<8x256xf32>
    %20 = vector.broadcast %17 : vector<1x256xf32> to vector<8x256xf32>
    %21 = arith.addf %19, %20 : vector<8x256xf32>
    %cst_17 = arith.constant 0.000000e+00 : f32
    %22 = vector.broadcast %cst_17 : f32 to vector<8x256xf32>
    %23 = arith.maximumf %21, %22 : vector<8x256xf32>
    %c0_18 = arith.constant 0 : index
    %c0_19 = arith.constant 0 : index
    %24 = vector.load %arg8[%c0_18, %c0_19] : memref<256x128xbf16, #tpu.memory_space<vmem>>, vector<256x128xbf16>
    %c0_20 = arith.constant 0 : index
    %c0_21 = arith.constant 0 : index
    %25 = vector.load %arg9[%c0_20, %c0_21] : memref<1x128xf32, #tpu.memory_space<vmem>>, vector<1x128xf32>
    %26 = arith.truncf %23 : vector<8x256xf32> to vector<8x256xbf16>
    %cst_22 = arith.constant dense<0.000000e+00> : vector<8x128xf32>
    %27 = tpu.matmul %26, %24, %cst_22 {dimension_numbers = #tpu.dot_dimension_numbers<[1], [0], [0], [1], [0, 0, 1, 1], [], []>} : vector<8x256xbf16>, vector<256x128xbf16>, vector<8x128xf32> -> vector<8x128xf32>
    %28 = vector.broadcast %25 : vector<1x128xf32> to vector<8x128xf32>
    %29 = arith.addf %27, %28 : vector<8x128xf32>
    %c0_23 = arith.constant 0 : index
    %c0_24 = arith.constant 0 : index
    %30 = vector.load %arg10[%c0_23, %c0_24] : memref<8x128xf32, #tpu.memory_space<vmem>>, vector<8x128xf32>
    tpu.vector_store %arg10[%c0_23, %c0_24], %29 {strides = array<i32>} : memref<8x128xf32, #tpu.memory_space<vmem>>, vector<8x128xf32>,
    return
  }
  func.func @transform_0(%arg0: i32) -> (i32, i32) {
    %c0_i32 = arith.constant 0 : i32
    %c0_i32_0 = arith.constant 0 : i32
    %c0_i32_1 = arith.constant 0 : i32
    return %c0_i32, %c0_i32_0 : i32, i32
  }
  func.func @transform_1(%arg0: i32) -> (i32, i32) {
    %c0_i32 = arith.constant 0 : i32
    %c0_i32_0 = arith.constant 0 : i32
    %c0_i32_1 = arith.constant 0 : i32
    return %c0_i32, %c0_i32_0 : i32, i32
  }
  func.func @transform_2(%arg0: i32) -> (i32, i32) {
    %c0_i32 = arith.constant 0 : i32
    %c0_i32_0 = arith.constant 0 : i32
    %c0_i32_1 = arith.constant 0 : i32
    return %c0_i32, %c0_i32_0 : i32, i32
  }
  func.func @transform_3(%arg0: i32) -> (i32, i32) {
    %c0_i32 = arith.constant 0 : i32
    %c0_i32_0 = arith.constant 0 : i32
    %c0_i32_1 = arith.constant 0 : i32
    return %c0_i32, %c0_i32_0 : i32, i32
  }
  func.func @transform_4(%arg0: i32) -> (i32, i32) {
    %c0_i32 = arith.constant 0 : i32
    %c0_i32_0 = arith.constant 0 : i32
    %c0_i32_1 = arith.constant 0 : i32
    return %c0_i32, %c0_i32_0 : i32, i32
  }
  func.func @transform_5(%arg0: i32) -> (i32, i32) {
    %c0_i32 = arith.constant 0 : i32
    %c0_i32_0 = arith.constant 0 : i32
    %c0_i32_1 = arith.constant 0 : i32
    return %c0_i32, %c0_i32_0 : i32, i32
  }
  func.func @transform_6(%arg0: i32) -> (i32, i32) {
    %c0_i32 = arith.constant 0 : i32
    %c0_i32_0 = arith.constant 0 : i32
    %c0_i32_1 = arith.constant 0 : i32
    return %c0_i32, %c0_i32_0 : i32, i32
  }
  func.func @transform_7(%arg0: i32) -> (i32, i32) {
    %c0_i32 = arith.constant 0 : i32
    %c0_i32_0 = arith.constant 0 : i32
    %c0_i32_1 = arith.constant 0 : i32
    return %c0_i32, %c0_i32_0 : i32, i32
  }
  func.func @transform_8(%arg0: i32) -> (i32, i32) {
    %c0_i32 = arith.constant 0 : i32
    %c0_i32_0 = arith.constant 0 : i32
    %c0_i32_1 = arith.constant 0 : i32
    return %c0_i32, %c0_i32_0 : i32, i32
  }
  func.func @transform_9(%arg0: i32) -> (i32, i32) {
    %c0_i32 = arith.constant 0 : i32
    %c0_i32_0 = arith.constant 0 : i32
    %c0_i32_1 = arith.constant 0 : i32
    return %c0_i32, %c0_i32_0 : i32, i32
  }
}

</mosaic_0001>

<llo_original>
// kernel: tpu_custom_call.1
$region0: #{tpu_custom_call.1}
  #allocation0 [shape = 'u32[]', space=smem, size = 0x4, offset = 0x4, fixed_abs, tag = 'smem constant byte address 0x4 - core index']
  #allocation1 [shape = 'u32[144,128]{1,0:T(1,128)}', space=vmem, size = 0x12000, scoped, tag = 'internal scratch']
  %s0 = inlined_call_operand.hbm [shape: bf16[8,1024], index: 0, kind: input, shape index: {}]
  %s1 = inlined_call_operand.hbm [shape: bf16[1024,256], index: 1, kind: input, shape index: {}]
  %s2 = inlined_call_operand.vmem [shape: f32[1,256], index: 2, kind: input, shape index: {}]
  %s3 = inlined_call_operand.hbm [shape: bf16[256,256], index: 3, kind: input, shape index: {}]
  %s4 = inlined_call_operand.vmem [shape: f32[1,256], index: 4, kind: input, shape index: {}]
  %s5 = inlined_call_operand.hbm [shape: bf16[256,256], index: 5, kind: input, shape index: {}]
  %s6 = inlined_call_operand.vmem [shape: f32[1,256], index: 6, kind: input, shape index: {}]
  %s7 = inlined_call_operand.hbm [shape: bf16[256,128], index: 7, kind: input, shape index: {}]
  %s8 = inlined_call_operand.vmem [shape: f32[1,128], index: 8, kind: input, shape index: {}]
  %s9 = inlined_call_operand.hbm [shape: f32[8,128], index: 9, kind: output, shape index: {}]
  %s10 = sld [smem:[#allocation0]]
  $region66: #{tpu_custom_call.1} parent=0
    _
  %s12 = ssub.s32 1, %s10
  %s13 = scalar_select 0, %s12, %s10
  $region1: #{tpu_custom_call.1} parent=0
    #allocation2 [shape = 'u8[16384]{0}', space=vmem, size = 0x4000, scoped, tag = 'input window, operand 0, single buffered']
    #allocation3 [shape = 's32[1]{0}', space=sflag, size = 0x4, scoped, tag = 'scoped memory for tpu_custom_call.1']
    #allocation4 [shape = 's32[1]{0}', space=sflag, size = 0x4, scoped, tag = 'scoped memory for tpu_custom_call.1']
    #allocation5 [shape = 'u8[524288]{0}', space=vmem, size = 0x80000, scoped, tag = 'input window, operand 1, single buffered']
    #allocation6 [shape = 's32[1]{0}', space=sflag, size = 0x4, scoped, tag = 'scoped memory for tpu_custom_call.1']
    #allocation7 [shape = 'u8[131072]{0}', space=vmem, size = 0x20000, scoped, tag = 'input window, operand 3, single buffered']
    #allocation8 [shape = 'u8[131072]{0}', space=vmem, size = 0x20000, scoped, tag = 'input window, operand 5, single buffered']
    #allocation9 [shape = 's32[1]{0}', space=sflag, size = 0x4, scoped, tag = 'scoped memory for tpu_custom_call.1']
    #allocation10 [shape = 'u8[65536]{0}', space=vmem, size = 0x10000, scoped, tag = 'input window, operand 7, single buffered']
    #allocation11 [shape = 'u8[4096]{0}', space=vmem, size = 0x1000, scoped, tag = 'output window, operand 0, single buffered']
    %14 = vsyncpa [#allocation3], 0
    %15 = vsyncpa [#allocation6], 0
    %16 = vsyncpa [#allocation9], 0
    %17 = vsyncpa [#allocation4], 0
    // Predicated region
    $region2: #{tpu_custom_call.1} parent=1 // pred_check
      _
    $region3: #{tpu_custom_call.1} parent=1 // pred_check_branch
      %19 = sbr.rel (0) target = $region5
    $region4: #{tpu_custom_call.1} parent=1 // pred_region
      %s21 = ssub.s32 512, 512
      %22 = vsyncadd [#allocation3], %s21
      %s24 = sshll.u32 [#allocation2], 4
      %s25 = int_to_ptr.vmem [resolvable:$true] %s24
      %27 = dma.hbm_to_vmem [thread:$0]  %s0, 512, %s25, [#allocation3]
    $region5: #{tpu_custom_call.1} parent=1 // pred_fallthru
      _
    // Predicated region
    $region6: #{tpu_custom_call.1} parent=1 // pred_check
      _
    $region7: #{tpu_custom_call.1} parent=1 // pred_check_branch
      %29 = sbr.rel (0) target = $region9
    $region8: #{tpu_custom_call.1} parent=1 // pred_region
      %s31 = ssub.s32 16384, 16384
      %32 = vsyncadd [#allocation6], %s31
      %s33 = sshll.u32 [#allocation5], 4
      %s34 = int_to_ptr.vmem [resolvable:$true] %s33
      %39 = dma.hbm_to_vmem [thread:$0]  %s1, 16384, %s34, [#allocation6], 128, 128, 8
    $region9: #{tpu_custom_call.1} parent=1 // pred_fallthru
      _
    // Predicated region
    $region10: #{tpu_custom_call.1} parent=1 // pred_check
      _
    $region11: #{tpu_custom_call.1} parent=1 // pred_check_branch
      %41 = sbr.rel (0) target = $region13
    $region12: #{tpu_custom_call.1} parent=1 // pred_region
      _
    $region13: #{tpu_custom_call.1} parent=1 // pred_fallthru
      _
    // Predicated region
    $region14: #{tpu_custom_call.1} parent=1 // pred_check
      _
    $region15: #{tpu_custom_call.1} parent=1 // pred_check_branch
      %43 = sbr.rel (0) target = $region17
    $region16: #{tpu_custom_call.1} parent=1 // pred_region
      %s45 = ssub.s32 4096, 4096
      %46 = vsyncadd [#allocation6], %s45
      %s47 = sshll.u32 [#allocation7], 4
      %s48 = int_to_ptr.vmem [resolvable:$true] %s47
      %53 = dma.hbm_to_vmem [thread:$0]  %s3, 4096, %s48, [#allocation6], 128, 128, 8
    $region17: #{tpu_custom_call.1} parent=1 // pred_fallthru
      _
    // Predicated region
    $region18: #{tpu_custom_call.1} parent=1 // pred_check
      _
    $region19: #{tpu_custom_call.1} parent=1 // pred_check_branch
      %55 = sbr.rel (0) target = $region21
    $region20: #{tpu_custom_call.1} parent=1 // pred_region
      _
    $region21: #{tpu_custom_call.1} parent=1 // pred_fallthru
      _
    // Predicated region
    $region22: #{tpu_custom_call.1} parent=1 // pred_check
      _
    $region23: #{tpu_custom_call.1} parent=1 // pred_check_branch
      %57 = sbr.rel (0) target = $region25
    $region24: #{tpu_custom_call.1} parent=1 // pred_region
      %s59 = ssub.s32 4096, 4096
      %60 = vsyncadd [#allocation9], %s59
      %s61 = sshll.u32 [#allocation8], 4
      %s62 = int_to_ptr.vmem [resolvable:$true] %s61
      %67 = dma.hbm_to_vmem [thread:$0]  %s5, 4096, %s62, [#allocation9], 128, 128, 8
    $region25: #{tpu_custom_call.1} parent=1 // pred_fallthru
      _
    // Predicated region
    $region26: #{tpu_custom_call.1} parent=1 // pred_check
      _
    $region27: #{tpu_custom_call.1} parent=1 // pred_check_branch
      %69 = sbr.rel (0) target = $region29
    $region28: #{tpu_custom_call.1} parent=1 // pred_region
      _
    $region29: #{tpu_custom_call.1} parent=1 // pred_fallthru
      _
    // Predicated region
    $region30: #{tpu_custom_call.1} parent=1 // pred_check
      _
    $region31: #{tpu_custom_call.1} parent=1 // pred_check_branch
      %71 = sbr.rel (0) target = $region33
    $region32: #{tpu_custom_call.1} parent=1 // pred_region
      %s73 = ssub.s32 2048, 2048
      %74 = vsyncadd [#allocation9], %s73
      %s75 = sshll.u32 [#allocation10], 4
      %s76 = int_to_ptr.vmem [resolvable:$true] %s75
      %81 = dma.hbm_to_vmem [thread:$0]  %s7, 2048, %s76, [#allocation9], 64, 64, 4
    $region33: #{tpu_custom_call.1} parent=1 // pred_fallthru
      _
    // Predicated region
    $region34: #{tpu_custom_call.1} parent=1 // pred_check
      _
    $region35: #{tpu_custom_call.1} parent=1 // pred_check_branch
      %83 = sbr.rel (0) target = $region37
    $region36: #{tpu_custom_call.1} parent=1 // pred_region
      _
    $region37: #{tpu_custom_call.1} parent=1 // pred_fallthru
      _
    // Predicated region
    $region38: #{tpu_custom_call.1} parent=1 // pred_check
      _
    $region39: #{tpu_custom_call.1} parent=1 // pred_check_branch
      %85 = sbr.rel (0) target = $region41
    $region40: #{tpu_custom_call.1} parent=1 // pred_region
      %86 = dma.done [#allocation3], 512
    $region41: #{tpu_custom_call.1} parent=1 // pred_fallthru
      _
    // Predicated region
    $region42: #{tpu_custom_call.1} parent=1 // pred_check
      _
    $region43: #{tpu_custom_call.1} parent=1 // pred_check_branch
      %88 = sbr.rel (0) target = $region45
    $region44: #{tpu_custom_call.1} parent=1 // pred_region
      %89 = dma.done [#allocation6], 16384
    $region45: #{tpu_custom_call.1} parent=1 // pred_fallthru
      _
    // Predicated region
    $region46: #{tpu_custom_call.1} parent=1 // pred_check
      _
    $region47: #{tpu_custom_call.1} parent=1 // pred_check_branch
      %91 = sbr.rel (0) target = $region49
    $region48: #{tpu_custom_call.1} parent=1 // pred_region
      %92 = dma.done [#allocation6], 4096
    $region49: #{tpu_custom_call.1} parent=1 // pred_fallthru
      _
    // Predicated region
    $region50: #{tpu_custom_call.1} parent=1 // pred_check
      _
    $region51: #{tpu_custom_call.1} parent=1 // pred_check_branch
      %94 = sbr.rel (0) target = $region53
    $region52: #{tpu_custom_call.1} parent=1 // pred_region
      %95 = dma.done [#allocation9], 4096
    $region53: #{tpu_custom_call.1} parent=1 // pred_fallthru
      _
    // Predicated region
    $region54: #{tpu_custom_call.1} parent=1 // pred_check
      _
    $region55: #{tpu_custom_call.1} parent=1 // pred_check_branch
      %97 = sbr.rel (0) target = $region57
    $region56: #{tpu_custom_call.1} parent=1 // pred_region
      %98 = dma.done [#allocation9], 2048
    $region57: #{tpu_custom_call.1} parent=1 // pred_fallthru
      _
    %v100 = vld [vmem:[#allocation2] sm:$0xff]
    %v101 = vld [vmem:[#allocation2 + $0x8] sm:$0xff]
    %v102 = vld [vmem:[#allocation2 + $0x10] sm:$0xff]
    %v103 = vld [vmem:[#allocation2 + $0x18] sm:$0xff]
    %v104 = vld [vmem:[#allocation5] sm:$0xff]
    %v105 = vld [vmem:[#allocation5 + $0x8] sm:$0xff]
    %v106 = vld [vmem:[#allocation5 + $0x10] sm:$0xff]
    %v107 = vld [vmem:[#allocation5 + $0x18] sm:$0xff]
    %v108 = vld [vmem:[#allocation5 + $0x20] sm:$0xff]
    %v109 = vld [vmem:[#allocation5 + $0x28] sm:$0xff]
    %v110 = vld [vmem:[#allocation5 + $0x30] sm:$0xff]
    %v111 = vld [vmem:[#allocation5 + $0x38] sm:$0xff]
    %v112 = vld [vmem:[#allocation5 + $0x40] sm:$0xff]
    %v113 = vld [vmem:[#allocation5 + $0x48] sm:$0xff]
    %v114 = vld [vmem:[#allocation5 + $0x50] sm:$0xff]
    %v115 = vld [vmem:[#allocation5 + $0x58] sm:$0xff]
    %v116 = vld [vmem:[#allocation5 + $0x60] sm:$0xff]
    %v117 = vld [vmem:[#allocation5 + $0x68] sm:$0xff]
    %v118 = vld [vmem:[#allocation5 + $0x70] sm:$0xff]
    %v119 = vld [vmem:[#allocation5 + $0x78] sm:$0xff]
    %v120 = vld [vmem:[#allocation5 + $0x80] sm:$0xff]
    %v121 = vld [vmem:[#allocation5 + $0x88] sm:$0xff]
    %v122 = vld [vmem:[#allocation5 + $0x90] sm:$0xff]
    %v123 = vld [vmem:[#allocation5 + $0x98] sm:$0xff]
    %v124 = vld [vmem:[#allocation5 + $0xa0] sm:$0xff]
    %v125 = vld [vmem:[#allocation5 + $0xa8] sm:$0xff]
    %v126 = vld [vmem:[#allocation5 + $0xb0] sm:$0xff]
    %v127 = vld [vmem:[#allocation5 + $0xb8] sm:$0xff]
    %v128 = vld [vmem:[#allocation5 + $0xc0] sm:$0xff]
    %v129 = vld [vmem:[#allocation5 + $0xc8] sm:$0xff]
    %v130 = vld [vmem:[#allocation5 + $0xd0] sm:$0xff]
    %v131 = vld [vmem:[#allocation5 + $0xd8] sm:$0xff]
    %v132 = vld [vmem:[#allocation5 + $0xe0] sm:$0xff]
    %v133 = vld [vmem:[#allocation5 + $0xe8] sm:$0xff]
    %v134 = vld [vmem:[#allocation5 + $0xf0] sm:$0xff]
    %v135 = vld [vmem:[#allocation5 + $0xf8] sm:$0xff]
    %v136 = vld [vmem:[#allocation5 + $0x100] sm:$0xff]
    %v137 = vld [vmem:[#allocation5 + $0x108] sm:$0xff]
    %v138 = vld [vmem:[#allocation5 + $0x110] sm:$0xff]
    %v139 = vld [vmem:[#allocation5 + $0x118] sm:$0xff]
    %v140 = vld [vmem:[#allocation5 + $0x120] sm:$0xff]
    %v141 = vld [vmem:[#allocation5 + $0x128] sm:$0xff]
    %v142 = vld [vmem:[#allocation5 + $0x130] sm:$0xff]
    %v143 = vld [vmem:[#allocation5 + $0x138] sm:$0xff]
    %v144 = vld [vmem:[#allocation5 + $0x140] sm:$0xff]
    %v145 = vld [vmem:[#allocation5 + $0x148] sm:$0xff]
    %v146 = vld [vmem:[#allocation5 + $0x150] sm:$0xff]
    %v147 = vld [vmem:[#allocation5 + $0x158] sm:$0xff]
    %v148 = vld [vmem:[#allocation5 + $0x160] sm:$0xff]
    %v149 = vld [vmem:[#allocation5 + $0x168] sm:$0xff]
    %v150 = vld [vmem:[#allocation5 + $0x170] sm:$0xff]
    %v151 = vld [vmem:[#allocation5 + $0x178] sm:$0xff]
    %v152 = vld [vmem:[#allocation5 + $0x180] sm:$0xff]
    %v153 = vld [vmem:[#allocation5 + $0x188] sm:$0xff]
    %v154 = vld [vmem:[#allocation5 + $0x190] sm:$0xff]
    %v155 = vld [vmem:[#allocation5 + $0x198] sm:$0xff]
    %v156 = vld [vmem:[#allocation5 + $0x1a0] sm:$0xff]
    %v157 = vld [vmem:[#allocation5 + $0x1a8] sm:$0xff]
    %v158 = vld [vmem:[#allocation5 + $0x1b0] sm:$0xff]
    %v159 = vld [vmem:[#allocation5 + $0x1b8] sm:$0xff]
    %v160 = vld [vmem:[#allocation5 + $0x1c0] sm:$0xff]
    %v161 = vld [vmem:[#allocation5 + $0x1c8] sm:$0xff]
    %v162 = vld [vmem:[#allocation5 + $0x1d0] sm:$0xff]
    %v163 = vld [vmem:[#allocation5 + $0x1d8] sm:$0xff]
    %v164 = vld [vmem:[#allocation5 + $0x1e0] sm:$0xff]
    %v165 = vld [vmem:[#allocation5 + $0x1e8] sm:$0xff]
    %v166 = vld [vmem:[#allocation5 + $0x1f0] sm:$0xff]
    %v167 = vld [vmem:[#allocation5 + $0x1f8] sm:$0xff]
    %v168 = vld [vmem:[#allocation5 + $0x200] sm:$0xff]
    %v169 = vld [vmem:[#allocation5 + $0x208] sm:$0xff]
    %v170 = vld [vmem:[#allocation5 + $0x210] sm:$0xff]
    %v171 = vld [vmem:[#allocation5 + $0x218] sm:$0xff]
    %v172 = vld [vmem:[#allocation5 + $0x220] sm:$0xff]
    %v173 = vld [vmem:[#allocation5 + $0x228] sm:$0xff]
    %v174 = vld [vmem:[#allocation5 + $0x230] sm:$0xff]
    %v175 = vld [vmem:[#allocation5 + $0x238] sm:$0xff]
    %v176 = vld [vmem:[#allocation5 + $0x240] sm:$0xff]
    %v177 = vld [vmem:[#allocation5 + $0x248] sm:$0xff]
    %v178 = vld [vmem:[#allocation5 + $0x250] sm:$0xff]
    %v179 = vld [vmem:[#allocation5 + $0x258] sm:$0xff]
    %v180 = vld [vmem:[#allocation5 + $0x260] sm:$0xff]
    %v181 = vld [vmem:[#allocation5 + $0x268] sm:$0xff]
    %v182 = vld [vmem:[#allocation5 + $0x270] sm:$0xff]
    %v183 = vld [vmem:[#allocation5 + $0x278] sm:$0xff]
    %v184 = vld [vmem:[#allocation5 + $0x280] sm:$0xff]
    %v185 = vld [vmem:[#allocation5 + $0x288] sm:$0xff]
    %v186 = vld [vmem:[#allocation5 + $0x290] sm:$0xff]
    %v187 = vld [vmem:[#allocation5 + $0x298] sm:$0xff]
    %v188 = vld [vmem:[#allocation5 + $0x2a0] sm:$0xff]
    %v189 = vld [vmem:[#allocation5 + $0x2a8] sm:$0xff]
    %v190 = vld [vmem:[#allocation5 + $0x2b0] sm:$0xff]
    %v191 = vld [vmem:[#allocation5 + $0x2b8] sm:$0xff]
    %v192 = vld [vmem:[#allocation5 + $0x2c0] sm:$0xff]
    %v193 = vld [vmem:[#allocation5 + $0x2c8] sm:$0xff]
    %v194 = vld [vmem:[#allocation5 + $0x2d0] sm:$0xff]
    %v195 = vld [vmem:[#allocation5 + $0x2d8] sm:$0xff]
    %v196 = vld [vmem:[#allocation5 + $0x2e0] sm:$0xff]
    %v197 = vld [vmem:[#allocation5 + $0x2e8] sm:$0xff]
    %v198 = vld [vmem:[#allocation5 + $0x2f0] sm:$0xff]
    %v199 = vld [vmem:[#allocation5 + $0x2f8] sm:$0xff]
    %v200 = vld [vmem:[#allocation5 + $0x300] sm:$0xff]
    %v201 = vld [vmem:[#allocation5 + $0x308] sm:$0xff]
    %v202 = vld [vmem:[#allocation5 + $0x310] sm:$0xff]
    %v203 = vld [vmem:[#allocation5 + $0x318] sm:$0xff]
    %v204 = vld [vmem:[#allocation5 + $0x320] sm:$0xff]
    %v205 = vld [vmem:[#allocation5 + $0x328] sm:$0xff]
    %v206 = vld [vmem:[#allocation5 + $0x330] sm:$0xff]
    %v207 = vld [vmem:[#allocation5 + $0x338] sm:$0xff]
    %v208 = vld [vmem:[#allocation5 + $0x340] sm:$0xff]
    %v209 = vld [vmem:[#allocation5 + $0x348] sm:$0xff]
    %v210 = vld [vmem:[#allocation5 + $0x350] sm:$0xff]
    %v211 = vld [vmem:[#allocation5 + $0x358] sm:$0xff]
    %v212 = vld [vmem:[#allocation5 + $0x360] sm:$0xff]
    %v213 = vld [vmem:[#allocation5 + $0x368] sm:$0xff]
    %v214 = vld [vmem:[#allocation5 + $0x370] sm:$0xff]
    %v215 = vld [vmem:[#allocation5 + $0x378] sm:$0xff]
    %v216 = vld [vmem:[#allocation5 + $0x380] sm:$0xff]
    %v217 = vld [vmem:[#allocation5 + $0x388] sm:$0xff]
    %v218 = vld [vmem:[#allocation5 + $0x390] sm:$0xff]
    %v219 = vld [vmem:[#allocation5 + $0x398] sm:$0xff]
    %v220 = vld [vmem:[#allocation5 + $0x3a0] sm:$0xff]
    %v221 = vld [vmem:[#allocation5 + $0x3a8] sm:$0xff]
    %v222 = vld [vmem:[#allocation5 + $0x3b0] sm:$0xff]
    %v223 = vld [vmem:[#allocation5 + $0x3b8] sm:$0xff]
    %v224 = vld [vmem:[#allocation5 + $0x3c0] sm:$0xff]
    %v225 = vld [vmem:[#allocation5 + $0x3c8] sm:$0xff]
    %v226 = vld [vmem:[#allocation5 + $0x3d0] sm:$0xff]
    %v227 = vld [vmem:[#allocation5 + $0x3d8] sm:$0xff]
    %v228 = vld [vmem:[#allocation5 + $0x3e0] sm:$0xff]
    %v229 = vld [vmem:[#allocation5 + $0x3e8] sm:$0xff]
    %v230 = vld [vmem:[#allocation5 + $0x3f0] sm:$0xff]
    %v231 = vld [vmem:[#allocation5 + $0x3f8] sm:$0xff]
    %v232 = vld [vmem:[%s2] sm:$0x3]
    %v234 = vlaneseq
    %v235 = vshrl.u32 %v234, 7
    %v236 = vsub.s32 0, %v235
    %v237 = vrot.slane %v232, %v236
    %v238 = vlaneseq
    %v239 = vshrl.u32 %v238, 7
    %v240 = vsub.s32 1, %v239
    %v241 = vrot.slane %v232, %v240
    %v248 = vunpack.c.l.b16 %v100
    %v249 = vunpack.c.h.b16 %v100
    %v250 = vunpack.c.l.b16 %v101
    %v251 = vunpack.c.h.b16 %v101
    %v252 = vunpack.c.l.b16 %v102
    %v253 = vunpack.c.h.b16 %v102
    %v254 = vunpack.c.l.b16 %v103
    %v255 = vunpack.c.h.b16 %v103
    %v256 = vpack.c.b16 %v248, %v248
    %v257 = vpack.c.b16 %v249, %v249
    %v258 = vpack.c.b16 %v250, %v250
    %v259 = vpack.c.b16 %v251, %v251
    %v260 = vpack.c.b16 %v252, %v252
    %v261 = vpack.c.b16 %v253, %v253
    %v262 = vpack.c.b16 %v254, %v254
    %v263 = vpack.c.b16 %v255, %v255
    %v400 = vunpack.c.l.b16 %v104
    %v401 = vunpack.c.h.b16 %v104
    %v402 = vunpack.c.l.b16 %v105
    %v403 = vunpack.c.h.b16 %v105
    %v404 = vunpack.c.l.b16 %v106
    %v405 = vunpack.c.h.b16 %v106
    %v406 = vunpack.c.l.b16 %v107
    %v407 = vunpack.c.h.b16 %v107
    %v408 = vunpack.c.l.b16 %v108
    %v409 = vunpack.c.h.b16 %v108
    %v410 = vunpack.c.l.b16 %v109
    %v411 = vunpack.c.h.b16 %v109
    %v412 = vunpack.c.l.b16 %v110
    %v413 = vunpack.c.h.b16 %v110
    %v414 = vunpack.c.l.b16 %v111
    %v415 = vunpack.c.h.b16 %v111
    %v416 = vunpack.c.l.b16 %v112
    %v417 = vunpack.c.h.b16 %v112
    %v418 = vunpack.c.l.b16 %v113
    %v419 = vunpack.c.h.b16 %v113
    %v420 = vunpack.c.l.b16 %v114
    %v421 = vunpack.c.h.b16 %v114
    %v422 = vunpack.c.l.b16 %v115
    %v423 = vunpack.c.h.b16 %v115
    %v424 = vunpack.c.l.b16 %v116
    %v425 = vunpack.c.h.b16 %v116
    %v426 = vunpack.c.l.b16 %v117
    %v427 = vunpack.c.h.b16 %v117
    %v428 = vunpack.c.l.b16 %v118
    %v429 = vunpack.c.h.b16 %v118
    %v430 = vunpack.c.l.b16 %v119
    %v431 = vunpack.c.h.b16 %v119
    %v432 = vunpack.c.l.b16 %v120
    %v433 = vunpack.c.h.b16 %v120
    %v434 = vunpack.c.l.b16 %v121
    %v435 = vunpack.c.h.b16 %v121
    %v436 = vunpack.c.l.b16 %v122
    %v437 = vunpack.c.h.b16 %v122
    %v438 = vunpack.c.l.b16 %v123
    %v439 = vunpack.c.h.b16 %v123
    %v440 = vunpack.c.l.b16 %v124
    %v441 = vunpack.c.h.b16 %v124
    %v442 = vunpack.c.l.b16 %v125
    %v443 = vunpack.c.h.b16 %v125
    %v444 = vunpack.c.l.b16 %v126
    %v445 = vunpack.c.h.b16 %v126
    %v446 = vunpack.c.l.b16 %v127
    %v447 = vunpack.c.h.b16 %v127
    %v448 = vunpack.c.l.b16 %v128
    %v449 = vunpack.c.h.b16 %v128
    %v450 = vunpack.c.l.b16 %v129
    %v451 = vunpack.c.h.b16 %v129
    %v452 = vunpack.c.l.b16 %v130
    %v453 = vunpack.c.h.b16 %v130
    %v454 = vunpack.c.l.b16 %v131
    %v455 = vunpack.c.h.b16 %v131
    %v456 = vunpack.c.l.b16 %v132
    %v457 = vunpack.c.h.b16 %v132
    %v458 = vunpack.c.l.b16 %v133
    %v459 = vunpack.c.h.b16 %v133
    %v460 = vunpack.c.l.b16 %v134
    %v461 = vunpack.c.h.b16 %v134
    %v462 = vunpack.c.l.b16 %v135
    %v463 = vunpack.c.h.b16 %v135
    %v464 = vunpack.c.l.b16 %v136
    %v465 = vunpack.c.h.b16 %v136
    %v466 = vunpack.c.l.b16 %v137
    %v467 = vunpack.c.h.b16 %v137
    %v468 = vunpack.c.l.b16 %v138
    %v469 = vunpack.c.h.b16 %v138
    %v470 = vunpack.c.l.b16 %v139
    %v471 = vunpack.c.h.b16 %v139
    %v472 = vunpack.c.l.b16 %v140
    %v473 = vunpack.c.h.b16 %v140
    %v474 = vunpack.c.l.b16 %v141
    %v475 = vunpack.c.h.b16 %v141
    %v476 = vunpack.c.l.b16 %v142
    %v477 = vunpack.c.h.b16 %v142
    %v478 = vunpack.c.l.b16 %v143
    %v479 = vunpack.c.h.b16 %v143
    %v480 = vunpack.c.l.b16 %v144
    %v481 = vunpack.c.h.b16 %v144
    %v482 = vunpack.c.l.b16 %v145
    %v483 = vunpack.c.h.b16 %v145
    %v484 = vunpack.c.l.b16 %v146
    %v485 = vunpack.c.h.b16 %v146
    %v486 = vunpack.c.l.b16 %v147
    %v487 = vunpack.c.h.b16 %v147
    %v488 = vunpack.c.l.b16 %v148
    %v489 = vunpack.c.h.b16 %v148
    %v490 = vunpack.c.l.b16 %v149
    %v491 = vunpack.c.h.b16 %v149
    %v492 = vunpack.c.l.b16 %v150
    %v493 = vunpack.c.h.b16 %v150
    %v494 = vunpack.c.l.b16 %v151
    %v495 = vunpack.c.h.b16 %v151
    %v496 = vunpack.c.l.b16 %v152
    %v497 = vunpack.c.h.b16 %v152
    %v498 = vunpack.c.l.b16 %v153
    %v499 = vunpack.c.h.b16 %v153
    %v500 = vunpack.c.l.b16 %v154
    %v501 = vunpack.c.h.b16 %v154
    %v502 = vunpack.c.l.b16 %v155
    %v503 = vunpack.c.h.b16 %v155
    %v504 = vunpack.c.l.b16 %v156
    %v505 = vunpack.c.h.b16 %v156
    %v506 = vunpack.c.l.b16 %v157
    %v507 = vunpack.c.h.b16 %v157
    %v508 = vunpack.c.l.b16 %v158
    %v509 = vunpack.c.h.b16 %v158
    %v510 = vunpack.c.l.b16 %v159
    %v511 = vunpack.c.h.b16 %v159
    %v512 = vunpack.c.l.b16 %v160
    %v513 = vunpack.c.h.b16 %v160
    %v514 = vunpack.c.l.b16 %v161
    %v515 = vunpack.c.h.b16 %v161
    %v516 = vunpack.c.l.b16 %v162
    %v517 = vunpack.c.h.b16 %v162
    %v518 = vunpack.c.l.b16 %v163
    %v519 = vunpack.c.h.b16 %v163
    %v520 = vunpack.c.l.b16 %v164
    %v521 = vunpack.c.h.b16 %v164
    %v522 = vunpack.c.l.b16 %v165
    %v523 = vunpack.c.h.b16 %v165
    %v524 = vunpack.c.l.b16 %v166
    %v525 = vunpack.c.h.b16 %v166
    %v526 = vunpack.c.l.b16 %v167
    %v527 = vunpack.c.h.b16 %v167
    %v528 = vunpack.c.l.b16 %v168
    %v529 = vunpack.c.h.b16 %v168
    %v530 = vunpack.c.l.b16 %v169
    %v531 = vunpack.c.h.b16 %v169
    %v532 = vunpack.c.l.b16 %v170
    %v533 = vunpack.c.h.b16 %v170
    %v534 = vunpack.c.l.b16 %v171
    %v535 = vunpack.c.h.b16 %v171
    %v536 = vunpack.c.l.b16 %v172
    %v537 = vunpack.c.h.b16 %v172
    %v538 = vunpack.c.l.b16 %v173
    %v539 = vunpack.c.h.b16 %v173
    %v540 = vunpack.c.l.b16 %v174
    %v541 = vunpack.c.h.b16 %v174
    %v542 = vunpack.c.l.b16 %v175
    %v543 = vunpack.c.h.b16 %v175
    %v544 = vunpack.c.l.b16 %v176
    %v545 = vunpack.c.h.b16 %v176
    %v546 = vunpack.c.l.b16 %v177
    %v547 = vunpack.c.h.b16 %v177
    %v548 = vunpack.c.l.b16 %v178
    %v549 = vunpack.c.h.b16 %v178
    %v550 = vunpack.c.l.b16 %v179
    %v551 = vunpack.c.h.b16 %v179
    %v552 = vunpack.c.l.b16 %v180
    %v553 = vunpack.c.h.b16 %v180
    %v554 = vunpack.c.l.b16 %v181
    %v555 = vunpack.c.h.b16 %v181
    %v556 = vunpack.c.l.b16 %v182
    %v557 = vunpack.c.h.b16 %v182
    %v558 = vunpack.c.l.b16 %v183
    %v559 = vunpack.c.h.b16 %v183
    %v560 = vunpack.c.l.b16 %v184
    %v561 = vunpack.c.h.b16 %v184
    %v562 = vunpack.c.l.b16 %v185
    %v563 = vunpack.c.h.b16 %v185
    %v564 = vunpack.c.l.b16 %v186
    %v565 = vunpack.c.h.b16 %v186
    %v566 = vunpack.c.l.b16 %v187
    %v567 = vunpack.c.h.b16 %v187
    %v568 = vunpack.c.l.b16 %v188
    %v569 = vunpack.c.h.b16 %v188
    %v570 = vunpack.c.l.b16 %v189
    %v571 = vunpack.c.h.b16 %v189
    %v572 = vunpack.c.l.b16 %v190
    %v573 = vunpack.c.h.b16 %v190
    %v574 = vunpack.c.l.b16 %v191
    %v575 = vunpack.c.h.b16 %v191
    %v576 = vunpack.c.l.b16 %v192
    %v577 = vunpack.c.h.b16 %v192
    %v578 = vunpack.c.l.b16 %v193
    %v579 = vunpack.c.h.b16 %v193
    %v580 = vunpack.c.l.b16 %v194
    %v581 = vunpack.c.h.b16 %v194
    %v582 = vunpack.c.l.b16 %v195
    %v583 = vunpack.c.h.b16 %v195
    %v584 = vunpack.c.l.b16 %v196
    %v585 = vunpack.c.h.b16 %v196
    %v586 = vunpack.c.l.b16 %v197
    %v587 = vunpack.c.h.b16 %v197
    %v588 = vunpack.c.l.b16 %v198
    %v589 = vunpack.c.h.b16 %v198
    %v590 = vunpack.c.l.b16 %v199
    %v591 = vunpack.c.h.b16 %v199
    %v592 = vunpack.c.l.b16 %v200
    %v593 = vunpack.c.h.b16 %v200
    %v594 = vunpack.c.l.b16 %v201
    %v595 = vunpack.c.h.b16 %v201
    %v596 = vunpack.c.l.b16 %v202
    %v597 = vunpack.c.h.b16 %v202
    %v598 = vunpack.c.l.b16 %v203
    %v599 = vunpack.c.h.b16 %v203
    %v600 = vunpack.c.l.b16 %v204
    %v601 = vunpack.c.h.b16 %v204
    %v602 = vunpack.c.l.b16 %v205
    %v603 = vunpack.c.h.b16 %v205
    %v604 = vunpack.c.l.b16 %v206
    %v605 = vunpack.c.h.b16 %v206
    %v606 = vunpack.c.l.b16 %v207
    %v607 = vunpack.c.h.b16 %v207
    %v608 = vunpack.c.l.b16 %v208
    %v609 = vunpack.c.h.b16 %v208
    %v610 = vunpack.c.l.b16 %v209
    %v611 = vunpack.c.h.b16 %v209
    %v612 = vunpack.c.l.b16 %v210
    %v613 = vunpack.c.h.b16 %v210
    %v614 = vunpack.c.l.b16 %v211
    %v615 = vunpack.c.h.b16 %v211
    %v616 = vunpack.c.l.b16 %v212
    %v617 = vunpack.c.h.b16 %v212
    %v618 = vunpack.c.l.b16 %v213
    %v619 = vunpack.c.h.b16 %v213
    %v620 = vunpack.c.l.b16 %v214
    %v621 = vunpack.c.h.b16 %v214
    %v622 = vunpack.c.l.b16 %v215
    %v623 = vunpack.c.h.b16 %v215
    %v624 = vunpack.c.l.b16 %v216
    %v625 = vunpack.c.h.b16 %v216
    %v626 = vunpack.c.l.b16 %v217
    %v627 = vunpack.c.h.b16 %v217
    %v628 = vunpack.c.l.b16 %v218
    %v629 = vunpack.c.h.b16 %v218
    %v630 = vunpack.c.l.b16 %v219
    %v631 = vunpack.c.h.b16 %v219
    %v632 = vunpack.c.l.b16 %v220
    %v633 = vunpack.c.h.b16 %v220
    %v634 = vunpack.c.l.b16 %v221
    %v635 = vunpack.c.h.b16 %v221
    %v636 = vunpack.c.l.b16 %v222
    %v637 = vunpack.c.h.b16 %v222
    %v638 = vunpack.c.l.b16 %v223
    %v639 = vunpack.c.h.b16 %v223
    %v640 = vunpack.c.l.b16 %v224
    %v641 = vunpack.c.h.b16 %v224
    %v642 = vunpack.c.l.b16 %v225
    %v643 = vunpack.c.h.b16 %v225
    %v644 = vunpack.c.l.b16 %v226
    %v645 = vunpack.c.h.b16 %v226
    %v646 = vunpack.c.l.b16 %v227
    %v647 = vunpack.c.h.b16 %v227
    %v648 = vunpack.c.l.b16 %v228
    %v649 = vunpack.c.h.b16 %v228
    %v650 = vunpack.c.l.b16 %v229
    %v651 = vunpack.c.h.b16 %v229
    %v652 = vunpack.c.l.b16 %v230
    %v653 = vunpack.c.h.b16 %v230
    %v654 = vunpack.c.l.b16 %v231
    %v655 = vunpack.c.h.b16 %v231
    %v656 = vpack.c.b16 %v402, %v400
    %v657 = vpack.c.b16 %v403, %v401
    %v658 = vpack.c.b16 %v406, %v404
    %v659 = vpack.c.b16 %v407, %v405
    %v660 = vpack.c.b16 %v410, %v408
    %v661 = vpack.c.b16 %v411, %v409
    %v662 = vpack.c.b16 %v414, %v412
    %v663 = vpack.c.b16 %v415, %v413
    %v664 = vpack.c.b16 %v418, %v416
    %v665 = vpack.c.b16 %v419, %v417
    %v666 = vpack.c.b16 %v422, %v420
    %v667 = vpack.c.b16 %v423, %v421
    %v668 = vpack.c.b16 %v426, %v424
    %v669 = vpack.c.b16 %v427, %v425
    %v670 = vpack.c.b16 %v430, %v428
    %v671 = vpack.c.b16 %v431, %v429
    %v672 = vpack.c.b16 %v434, %v432
    %v673 = vpack.c.b16 %v435, %v433
    %v674 = vpack.c.b16 %v438, %v436
    %v675 = vpack.c.b16 %v439, %v437
    %v676 = vpack.c.b16 %v442, %v440
    %v677 = vpack.c.b16 %v443, %v441
    %v678 = vpack.c.b16 %v446, %v444
    %v679 = vpack.c.b16 %v447, %v445
    %v680 = vpack.c.b16 %v450, %v448
    %v681 = vpack.c.b16 %v451, %v449
    %v682 = vpack.c.b16 %v454, %v452
    %v683 = vpack.c.b16 %v455, %v453
    %v684 = vpack.c.b16 %v458, %v456
    %v685 = vpack.c.b16 %v459, %v457
    %v686 = vpack.c.b16 %v462, %v460
    %v687 = vpack.c.b16 %v463, %v461
    %v688 = vpack.c.b16 %v466, %v464
    %v689 = vpack.c.b16 %v467, %v465
    %v690 = vpack.c.b16 %v470, %v468
    %v691 = vpack.c.b16 %v471, %v469
    %v692 = vpack.c.b16 %v474, %v472
    %v693 = vpack.c.b16 %v475, %v473
    %v694 = vpack.c.b16 %v478, %v476
    %v695 = vpack.c.b16 %v479, %v477
    %v696 = vpack.c.b16 %v482, %v480
    %v697 = vpack.c.b16 %v483, %v481
    %v698 = vpack.c.b16 %v486, %v484
    %v699 = vpack.c.b16 %v487, %v485
    %v700 = vpack.c.b16 %v490, %v488
    %v701 = vpack.c.b16 %v491, %v489
    %v702 = vpack.c.b16 %v494, %v492
    %v703 = vpack.c.b16 %v495, %v493
    %v704 = vpack.c.b16 %v498, %v496
    %v705 = vpack.c.b16 %v499, %v497
    %v706 = vpack.c.b16 %v502, %v500
    %v707 = vpack.c.b16 %v503, %v501
    %v708 = vpack.c.b16 %v506, %v504
    %v709 = vpack.c.b16 %v507, %v505
    %v710 = vpack.c.b16 %v510, %v508
    %v711 = vpack.c.b16 %v511, %v509
    %v712 = vpack.c.b16 %v514, %v512
    %v713 = vpack.c.b16 %v515, %v513
    %v714 = vpack.c.b16 %v518, %v516
    %v715 = vpack.c.b16 %v519, %v517
    %v716 = vpack.c.b16 %v522, %v520
    %v717 = vpack.c.b16 %v523, %v521
    %v718 = vpack.c.b16 %v526, %v524
    %v719 = vpack.c.b16 %v527, %v525
    %v720 = vpack.c.b16 %v530, %v528
    %v721 = vpack.c.b16 %v531, %v529
    %v722 = vpack.c.b16 %v534, %v532
    %v723 = vpack.c.b16 %v535, %v533
    %v724 = vpack.c.b16 %v538, %v536
    %v725 = vpack.c.b16 %v539, %v537
    %v726 = vpack.c.b16 %v542, %v540
    %v727 = vpack.c.b16 %v543, %v541
    %v728 = vpack.c.b16 %v546, %v544
    %v729 = vpack.c.b16 %v547, %v545
    %v730 = vpack.c.b16 %v550, %v548
    %v731 = vpack.c.b16 %v551, %v549
    %v732 = vpack.c.b16 %v554, %v552
    %v733 = vpack.c.b16 %v555, %v553
    %v734 = vpack.c.b16 %v558, %v556
    %v735 = vpack.c.b16 %v559, %v557
    %v736 = vpack.c.b16 %v562, %v560
    %v737 = vpack.c.b16 %v563, %v561
    %v738 = vpack.c.b16 %v566, %v564
    %v739 = vpack.c.b16 %v567, %v565
    %v740 = vpack.c.b16 %v570, %v568
    %v741 = vpack.c.b16 %v571, %v569
    %v742 = vpack.c.b16 %v574, %v572
    %v743 = vpack.c.b16 %v575, %v573
    %v744 = vpack.c.b16 %v578, %v576
    %v745 = vpack.c.b16 %v579, %v577
    %v746 = vpack.c.b16 %v582, %v580
    %v747 = vpack.c.b16 %v583, %v581
    %v748 = vpack.c.b16 %v586, %v584
    %v749 = vpack.c.b16 %v587, %v585
    %v750 = vpack.c.b16 %v590, %v588
    %v751 = vpack.c.b16 %v591, %v589
    %v752 = vpack.c.b16 %v594, %v592
    %v753 = vpack.c.b16 %v595, %v593
    %v754 = vpack.c.b16 %v598, %v596
    %v755 = vpack.c.b16 %v599, %v597
    %v756 = vpack.c.b16 %v602, %v600
    %v757 = vpack.c.b16 %v603, %v601
    %v758 = vpack.c.b16 %v606, %v604
    %v759 = vpack.c.b16 %v607, %v605
    %v760 = vpack.c.b16 %v610, %v608
    %v761 = vpack.c.b16 %v611, %v609
    %v762 = vpack.c.b16 %v614, %v612
    %v763 = vpack.c.b16 %v615, %v613
    %v764 = vpack.c.b16 %v618, %v616
    %v765 = vpack.c.b16 %v619, %v617
    %v766 = vpack.c.b16 %v622, %v620
    %v767 = vpack.c.b16 %v623, %v621
    %v768 = vpack.c.b16 %v626, %v624
    %v769 = vpack.c.b16 %v627, %v625
    %v770 = vpack.c.b16 %v630, %v628
    %v771 = vpack.c.b16 %v631, %v629
    %v772 = vpack.c.b16 %v634, %v632
    %v773 = vpack.c.b16 %v635, %v633
    %v774 = vpack.c.b16 %v638, %v636
    %v775 = vpack.c.b16 %v639, %v637
    %v776 = vpack.c.b16 %v642, %v640
    %v777 = vpack.c.b16 %v643, %v641
    %v778 = vpack.c.b16 %v646, %v644
    %v779 = vpack.c.b16 %v647, %v645
    %v780 = vpack.c.b16 %v650, %v648
    %v781 = vpack.c.b16 %v651, %v649
    %v782 = vpack.c.b16 %v654, %v652
    %v783 = vpack.c.b16 %v655, %v653
    %912 = vmatprep.subr.bf16.mxu0 %v657
    %913 = vmatpush1.bf16.msra.mxu0 %v656
    %914 = vmatprep.subr.bf16.mxu0 %v659
    %915 = vmatpush1.bf16.msra.mxu0 %v658
    %916 = vmatprep.subr.bf16.mxu0 %v661
    %917 = vmatpush1.bf16.msra.mxu0 %v660
    %918 = vmatprep.subr.bf16.mxu0 %v663
    %919 = vmatpush1.bf16.msra.mxu0 %v662
    %920 = vmatprep.subr.bf16.mxu0 %v665
    %921 = vmatpush1.bf16.msra.mxu0 %v664
    %922 = vmatprep.subr.bf16.mxu0 %v667
    %923 = vmatpush1.bf16.msra.mxu0 %v666
    %924 = vmatprep.subr.bf16.mxu0 %v669
    %925 = vmatpush1.bf16.msra.mxu0 %v668
    %926 = vmatprep.subr.bf16.mxu0 %v671
    %927 = vmatpush1.bf16.msra.mxu0 %v670
    %928 = vmatprep.subr.bf16.mxu0 %v673
    %929 = vmatpush1.bf16.msra.mxu0 %v672
    %930 = vmatprep.subr.bf16.mxu0 %v675
    %931 = vmatpush1.bf16.msra.mxu0 %v674
    %932 = vmatprep.subr.bf16.mxu0 %v677
    %933 = vmatpush1.bf16.msra.mxu0 %v676
    %934 = vmatprep.subr.bf16.mxu0 %v679
    %935 = vmatpush1.bf16.msra.mxu0 %v678
    %936 = vmatprep.subr.bf16.mxu0 %v681
    %937 = vmatpush1.bf16.msra.mxu0 %v680
    %938 = vmatprep.subr.bf16.mxu0 %v683
    %939 = vmatpush1.bf16.msra.mxu0 %v682
    %940 = vmatprep.subr.bf16.mxu0 %v685
    %941 = vmatpush1.bf16.msra.mxu0 %v684
    %942 = vmatprep.subr.bf16.mxu0 %v687
    %943 = vmatpush1.bf16.msra.mxu0 %v686
    %944 = vmatprep.mubr.bf16.mxu0 %v257
    %945 = vmatmul.mubr.bf16.gmra.mrb[0].mxu0 %v256
    %v946 = vpop.f32.mrb[0].mxu0
    %v947 = vadd.f32 %v237, %v946
    %v948 = vpop.f32.mrb[0].mxu0
    %v949 = vadd.f32 %v241, %v948
    %v950 = vpop.f32.mrb[0].mxu0
    %v951 = vpop.f32.mrb[0].mxu0
    %952 = vdwg.mxu0
    %953 = vmatprep.subr.bf16.mxu0 %v689
    %954 = vmatpush1.bf16.msra.mxu0 %v688
    %955 = vmatprep.subr.bf16.mxu0 %v691
    %956 = vmatpush1.bf16.msra.mxu0 %v690
    %957 = vmatprep.subr.bf16.mxu0 %v693
    %958 = vmatpush1.bf16.msra.mxu0 %v692
    %959 = vmatprep.subr.bf16.mxu0 %v695
    %960 = vmatpush1.bf16.msra.mxu0 %v694
    %961 = vmatprep.subr.bf16.mxu0 %v697
    %962 = vmatpush1.bf16.msra.mxu0 %v696
    %963 = vmatprep.subr.bf16.mxu0 %v699
    %964 = vmatpush1.bf16.msra.mxu0 %v698
    %965 = vmatprep.subr.bf16.mxu0 %v701
    %966 = vmatpush1.bf16.msra.mxu0 %v700
    %967 = vmatprep.subr.bf16.mxu0 %v703
    %968 = vmatpush1.bf16.msra.mxu0 %v702
    %969 = vmatprep.subr.bf16.mxu0 %v705
    %970 = vmatpush1.bf16.msra.mxu0 %v704
    %971 = vmatprep.subr.bf16.mxu0 %v707
    %972 = vmatpush1.bf16.msra.mxu0 %v706
    %973 = vmatprep.subr.bf16.mxu0 %v709
    %974 = vmatpush1.bf16.msra.mxu0 %v708
    %975 = vmatprep.subr.bf16.mxu0 %v711
    %976 = vmatpush1.bf16.msra.mxu0 %v710
    %977 = vmatprep.subr.bf16.mxu0 %v713
    %978 = vmatpush1.bf16.msra.mxu0 %v712
    %979 = vmatprep.subr.bf16.mxu0 %v715
    %980 = vmatpush1.bf16.msra.mxu0 %v714
    %981 = vmatprep.subr.bf16.mxu0 %v717
    %982 = vmatpush1.bf16.msra.mxu0 %v716
    %983 = vmatprep.subr.bf16.mxu0 %v719
    %984 = vmatpush1.bf16.msra.mxu0 %v718
    %985 = vmatprep.mubr.bf16.mxu0 %v259
    %986 = vmatmul.mubr.bf16.gmra.mrb[0].mxu0 %v258
    %v987 = vpop.f32.mrb[0].mxu0
    %v988 = vadd.f32 %v947, %v987
    %v989 = vpop.f32.mrb[0].mxu0
    %v990 = vadd.f32 %v949, %v989
    %v991 = vpop.f32.mrb[0].mxu0
    %v992 = vpop.f32.mrb[0].mxu0
    %993 = vdwg.mxu0
    %994 = vmatprep.subr.bf16.mxu0 %v721
    %995 = vmatpush1.bf16.msra.mxu0 %v720
    %996 = vmatprep.subr.bf16.mxu0 %v723
    %997 = vmatpush1.bf16.msra.mxu0 %v722
    %998 = vmatprep.subr.bf16.mxu0 %v725
    %999 = vmatpush1.bf16.msra.mxu0 %v724
    %1000 = vmatprep.subr.bf16.mxu0 %v727
    %1001 = vmatpush1.bf16.msra.mxu0 %v726
    %1002 = vmatprep.subr.bf16.mxu0 %v729
    %1003 = vmatpush1.bf16.msra.mxu0 %v728
    %1004 = vmatprep.subr.bf16.mxu0 %v731
    %1005 = vmatpush1.bf16.msra.mxu0 %v730
    %1006 = vmatprep.subr.bf16.mxu0 %v733
    %1007 = vmatpush1.bf16.msra.mxu0 %v732
    %1008 = vmatprep.subr.bf16.mxu0 %v735
    %1009 = vmatpush1.bf16.msra.mxu0 %v734
    %1010 = vmatprep.subr.bf16.mxu0 %v737
    %1011 = vmatpush1.bf16.msra.mxu0 %v736
    %1012 = vmatprep.subr.bf16.mxu0 %v739
    %1013 = vmatpush1.bf16.msra.mxu0 %v738
    %1014 = vmatprep.subr.bf16.mxu0 %v741
    %1015 = vmatpush1.bf16.msra.mxu0 %v740
    %1016 = vmatprep.subr.bf16.mxu0 %v743
    %1017 = vmatpush1.bf16.msra.mxu0 %v742
    %1018 = vmatprep.subr.bf16.mxu0 %v745
    %1019 = vmatpush1.bf16.msra.mxu0 %v744
    %1020 = vmatprep.subr.bf16.mxu0 %v747
    %1021 = vmatpush1.bf16.msra.mxu0 %v746
    %1022 = vmatprep.subr.bf16.mxu0 %v749
    %1023 = vmatpush1.bf16.msra.mxu0 %v748
    %1024 = vmatprep.subr.bf16.mxu0 %v751
    %1025 = vmatpush1.bf16.msra.mxu0 %v750
    %1026 = vmatprep.mubr.bf16.mxu0 %v261
    %1027 = vmatmul.mubr.bf16.gmra.mrb[0].mxu0 %v260
    %v1028 = vpop.f32.mrb[0].mxu0
    %v1029 = vadd.f32 %v988, %v1028
    %v1030 = vpop.f32.mrb[0].mxu0
    %v1031 = vadd.f32 %v990, %v1030
    %v1032 = vpop.f32.mrb[0].mxu0
    %v1033 = vpop.f32.mrb[0].mxu0
    %1034 = vdwg.mxu0
    %1035 = vmatprep.subr.bf16.mxu0 %v753
    %1036 = vmatpush1.bf16.msra.mxu0 %v752
    %1037 = vmatprep.subr.bf16.mxu0 %v755
    %1038 = vmatpush1.bf16.msra.mxu0 %v754
    %1039 = vmatprep.subr.bf16.mxu0 %v757
    %1040 = vmatpush1.bf16.msra.mxu0 %v756
    %1041 = vmatprep.subr.bf16.mxu0 %v759
    %1042 = vmatpush1.bf16.msra.mxu0 %v758
    %1043 = vmatprep.subr.bf16.mxu0 %v761
    %1044 = vmatpush1.bf16.msra.mxu0 %v760
    %1045 = vmatprep.subr.bf16.mxu0 %v763
    %1046 = vmatpush1.bf16.msra.mxu0 %v762
    %1047 = vmatprep.subr.bf16.mxu0 %v765
    %1048 = vmatpush1.bf16.msra.mxu0 %v764
    %1049 = vmatprep.subr.bf16.mxu0 %v767
    %1050 = vmatpush1.bf16.msra.mxu0 %v766
    %1051 = vmatprep.subr.bf16.mxu0 %v769
    %1052 = vmatpush1.bf16.msra.mxu0 %v768
    %1053 = vmatprep.subr.bf16.mxu0 %v771
    %1054 = vmatpush1.bf16.msra.mxu0 %v770
    %1055 = vmatprep.subr.bf16.mxu0 %v773
    %1056 = vmatpush1.bf16.msra.mxu0 %v772
    %1057 = vmatprep.subr.bf16.mxu0 %v775
    %1058 = vmatpush1.bf16.msra.mxu0 %v774
    %1059 = vmatprep.subr.bf16.mxu0 %v777
    %1060 = vmatpush1.bf16.msra.mxu0 %v776
    %1061 = vmatprep.subr.bf16.mxu0 %v779
    %1062 = vmatpush1.bf16.msra.mxu0 %v778
    %1063 = vmatprep.subr.bf16.mxu0 %v781
    %1064 = vmatpush1.bf16.msra.mxu0 %v780
    %1065 = vmatprep.subr.bf16.mxu0 %v783
    %1066 = vmatpush1.bf16.msra.mxu0 %v782
    %1067 = vmatprep.mubr.bf16.mxu0 %v263
    %1068 = vmatmul.mubr.bf16.gmra.mrb[0].mxu0 %v262
    %v1069 = vpop.f32.mrb[0].mxu0
    %v1070 = vadd.f32 %v1029, %v1069
    %v1071 = vpop.f32.mrb[0].mxu0
    %v1072 = vadd.f32 %v1031, %v1071
    %v1073 = vpop.f32.mrb[0].mxu0
    %v1074 = vpop.f32.mrb[0].mxu0
    %1075 = vdwg.mxu0
    %v1076 = vmax.f32 %v1070, 0.0
    %v1077 = vmax.f32 %v1072, 0.0
    %v1078 = vld [vmem:[#allocation7] sm:$0xff]
    %v1079 = vld [vmem:[#allocation7 + $0x8] sm:$0xff]
    %v1080 = vld [vmem:[#allocation7 + $0x10] sm:$0xff]
    %v1081 = vld [vmem:[#allocation7 + $0x18] sm:$0xff]
    %v1082 = vld [vmem:[#allocation7 + $0x20] sm:$0xff]
    %v1083 = vld [vmem:[#allocation7 + $0x28] sm:$0xff]
    %v1084 = vld [vmem:[#allocation7 + $0x30] sm:$0xff]
    %v1085 = vld [vmem:[#allocation7 + $0x38] sm:$0xff]
    %v1086 = vld [vmem:[#allocation7 + $0x40] sm:$0xff]
    %v1087 = vld [vmem:[#allocation7 + $0x48] sm:$0xff]
    %v1088 = vld [vmem:[#allocation7 + $0x50] sm:$0xff]
    %v1089 = vld [vmem:[#allocation7 + $0x58] sm:$0xff]
    %v1090 = vld [vmem:[#allocation7 + $0x60] sm:$0xff]
    %v1091 = vld [vmem:[#allocation7 + $0x68] sm:$0xff]
    %v1092 = vld [vmem:[#allocation7 + $0x70] sm:$0xff]
    %v1093 = vld [vmem:[#allocation7 + $0x78] sm:$0xff]
    %v1094 = vld [vmem:[#allocation7 + $0x80] sm:$0xff]
    %v1095 = vld [vmem:[#allocation7 + $0x88] sm:$0xff]
    %v1096 = vld [vmem:[#allocation7 + $0x90] sm:$0xff]
    %v1097 = vld [vmem:[#allocation7 + $0x98] sm:$0xff]
    %v1098 = vld [vmem:[#allocation7 + $0xa0] sm:$0xff]
    %v1099 = vld [vmem:[#allocation7 + $0xa8] sm:$0xff]
    %v1100 = vld [vmem:[#allocation7 + $0xb0] sm:$0xff]
    %v1101 = vld [vmem:[#allocation7 + $0xb8] sm:$0xff]
    %v1102 = vld [vmem:[#allocation7 + $0xc0] sm:$0xff]
    %v1103 = vld [vmem:[#allocation7 + $0xc8] sm:$0xff]
    %v1104 = vld [vmem:[#allocation7 + $0xd0] sm:$0xff]
    %v1105 = vld [vmem:[#allocation7 + $0xd8] sm:$0xff]
    %v1106 = vld [vmem:[#allocation7 + $0xe0] sm:$0xff]
    %v1107 = vld [vmem:[#allocation7 + $0xe8] sm:$0xff]
    %v1108 = vld [vmem:[#allocation7 + $0xf0] sm:$0xff]
    %v1109 = vld [vmem:[#allocation7 + $0xf8] sm:$0xff]
    %v1110 = vld [vmem:[%s4] sm:$0x3]
    %v1111 = vpack.c.bf16 %v1076, %v1076
    %v1112 = vpack.c.bf16 %v1077, %v1077
    %v1114 = vlaneseq
    %v1115 = vshrl.u32 %v1114, 7
    %v1116 = vsub.s32 0, %v1115
    %v1117 = vrot.slane %v1110, %v1116
    %v1118 = vlaneseq
    %v1119 = vshrl.u32 %v1118, 7
    %v1120 = vsub.s32 1, %v1119
    %v1121 = vrot.slane %v1110, %v1120
    %v1156 = vunpack.c.l.b16 %v1078
    %v1157 = vunpack.c.h.b16 %v1078
    %v1158 = vunpack.c.l.b16 %v1079
    %v1159 = vunpack.c.h.b16 %v1079
    %v1160 = vunpack.c.l.b16 %v1080
    %v1161 = vunpack.c.h.b16 %v1080
    %v1162 = vunpack.c.l.b16 %v1081
    %v1163 = vunpack.c.h.b16 %v1081
    %v1164 = vunpack.c.l.b16 %v1082
    %v1165 = vunpack.c.h.b16 %v1082
    %v1166 = vunpack.c.l.b16 %v1083
    %v1167 = vunpack.c.h.b16 %v1083
    %v1168 = vunpack.c.l.b16 %v1084
    %v1169 = vunpack.c.h.b16 %v1084
    %v1170 = vunpack.c.l.b16 %v1085
    %v1171 = vunpack.c.h.b16 %v1085
    %v1172 = vunpack.c.l.b16 %v1086
    %v1173 = vunpack.c.h.b16 %v1086
    %v1174 = vunpack.c.l.b16 %v1087
    %v1175 = vunpack.c.h.b16 %v1087
    %v1176 = vunpack.c.l.b16 %v1088
    %v1177 = vunpack.c.h.b16 %v1088
    %v1178 = vunpack.c.l.b16 %v1089
    %v1179 = vunpack.c.h.b16 %v1089
    %v1180 = vunpack.c.l.b16 %v1090
    %v1181 = vunpack.c.h.b16 %v1090
    %v1182 = vunpack.c.l.b16 %v1091
    %v1183 = vunpack.c.h.b16 %v1091
    %v1184 = vunpack.c.l.b16 %v1092
    %v1185 = vunpack.c.h.b16 %v1092
    %v1186 = vunpack.c.l.b16 %v1093
    %v1187 = vunpack.c.h.b16 %v1093
    %v1188 = vunpack.c.l.b16 %v1094
    %v1189 = vunpack.c.h.b16 %v1094
    %v1190 = vunpack.c.l.b16 %v1095
    %v1191 = vunpack.c.h.b16 %v1095
    %v1192 = vunpack.c.l.b16 %v1096
    %v1193 = vunpack.c.h.b16 %v1096
    %v1194 = vunpack.c.l.b16 %v1097
    %v1195 = vunpack.c.h.b16 %v1097
    %v1196 = vunpack.c.l.b16 %v1098
    %v1197 = vunpack.c.h.b16 %v1098
    %v1198 = vunpack.c.l.b16 %v1099
    %v1199 = vunpack.c.h.b16 %v1099
    %v1200 = vunpack.c.l.b16 %v1100
    %v1201 = vunpack.c.h.b16 %v1100
    %v1202 = vunpack.c.l.b16 %v1101
    %v1203 = vunpack.c.h.b16 %v1101
    %v1204 = vunpack.c.l.b16 %v1102
    %v1205 = vunpack.c.h.b16 %v1102
    %v1206 = vunpack.c.l.b16 %v1103
    %v1207 = vunpack.c.h.b16 %v1103
    %v1208 = vunpack.c.l.b16 %v1104
    %v1209 = vunpack.c.h.b16 %v1104
    %v1210 = vunpack.c.l.b16 %v1105
    %v1211 = vunpack.c.h.b16 %v1105
    %v1212 = vunpack.c.l.b16 %v1106
    %v1213 = vunpack.c.h.b16 %v1106
    %v1214 = vunpack.c.l.b16 %v1107
    %v1215 = vunpack.c.h.b16 %v1107
    %v1216 = vunpack.c.l.b16 %v1108
    %v1217 = vunpack.c.h.b16 %v1108
    %v1218 = vunpack.c.l.b16 %v1109
    %v1219 = vunpack.c.h.b16 %v1109
    %v1220 = vpack.c.b16 %v1158, %v1156
    %v1221 = vpack.c.b16 %v1159, %v1157
    %v1222 = vpack.c.b16 %v1162, %v1160
    %v1223 = vpack.c.b16 %v1163, %v1161
    %v1224 = vpack.c.b16 %v1166, %v1164
    %v1225 = vpack.c.b16 %v1167, %v1165
    %v1226 = vpack.c.b16 %v1170, %v1168
    %v1227 = vpack.c.b16 %v1171, %v1169
    %v1228 = vpack.c.b16 %v1174, %v1172
    %v1229 = vpack.c.b16 %v1175, %v1173
    %v1230 = vpack.c.b16 %v1178, %v1176
    %v1231 = vpack.c.b16 %v1179, %v1177
    %v1232 = vpack.c.b16 %v1182, %v1180
    %v1233 = vpack.c.b16 %v1183, %v1181
    %v1234 = vpack.c.b16 %v1186, %v1184
    %v1235 = vpack.c.b16 %v1187, %v1185
    %v1236 = vpack.c.b16 %v1190, %v1188
    %v1237 = vpack.c.b16 %v1191, %v1189
    %v1238 = vpack.c.b16 %v1194, %v1192
    %v1239 = vpack.c.b16 %v1195, %v1193
    %v1240 = vpack.c.b16 %v1198, %v1196
    %v1241 = vpack.c.b16 %v1199, %v1197
    %v1242 = vpack.c.b16 %v1202, %v1200
    %v1243 = vpack.c.b16 %v1203, %v1201
    %v1244 = vpack.c.b16 %v1206, %v1204
    %v1245 = vpack.c.b16 %v1207, %v1205
    %v1246 = vpack.c.b16 %v1210, %v1208
    %v1247 = vpack.c.b16 %v1211, %v1209
    %v1248 = vpack.c.b16 %v1214, %v1212
    %v1249 = vpack.c.b16 %v1215, %v1213
    %v1250 = vpack.c.b16 %v1218, %v1216
    %v1251 = vpack.c.b16 %v1219, %v1217
    %1284 = vmatprep.subr.bf16.mxu0 %v1221
    %1285 = vmatpush1.bf16.msra.mxu0 %v1220
    %1286 = vmatprep.subr.bf16.mxu0 %v1223
    %1287 = vmatpush1.bf16.msra.mxu0 %v1222
    %1288 = vmatprep.subr.bf16.mxu0 %v1225
    %1289 = vmatpush1.bf16.msra.mxu0 %v1224
    %1290 = vmatprep.subr.bf16.mxu0 %v1227
    %1291 = vmatpush1.bf16.msra.mxu0 %v1226
    %1292 = vmatprep.subr.bf16.mxu0 %v1229
    %1293 = vmatpush1.bf16.msra.mxu0 %v1228
    %1294 = vmatprep.subr.bf16.mxu0 %v1231
    %1295 = vmatpush1.bf16.msra.mxu0 %v1230
    %1296 = vmatprep.subr.bf16.mxu0 %v1233
    %1297 = vmatpush1.bf16.msra.mxu0 %v1232
    %1298 = vmatprep.subr.bf16.mxu0 %v1235
    %1299 = vmatpush1.bf16.msra.mxu0 %v1234
    %1300 = vmatprep.subr.bf16.mxu0 %v1237
    %1301 = vmatpush1.bf16.msra.mxu0 %v1236
    %1302 = vmatprep.subr.bf16.mxu0 %v1239
    %1303 = vmatpush1.bf16.msra.mxu0 %v1238
    %1304 = vmatprep.subr.bf16.mxu0 %v1241
    %1305 = vmatpush1.bf16.msra.mxu0 %v1240
    %1306 = vmatprep.subr.bf16.mxu0 %v1243
    %1307 = vmatpush1.bf16.msra.mxu0 %v1242
    %1308 = vmatprep.subr.bf16.mxu0 %v1245
    %1309 = vmatpush1.bf16.msra.mxu0 %v1244
    %1310 = vmatprep.subr.bf16.mxu0 %v1247
    %1311 = vmatpush1.bf16.msra.mxu0 %v1246
    %1312 = vmatprep.subr.bf16.mxu0 %v1249
    %1313 = vmatpush1.bf16.msra.mxu0 %v1248
    %1314 = vmatprep.subr.bf16.mxu0 %v1251
    %1315 = vmatpush1.bf16.msra.mxu0 %v1250
    %1316 = vmatprep.mubr.bf16.mxu0 %v1112
    %1317 = vmatmul.mubr.bf16.gmra.mrb[0].mxu0 %v1111
    %v1318 = vpop.f32.mrb[0].mxu0
    %v1319 = vadd.f32 %v1117, %v1318
    %v1320 = vpop.f32.mrb[0].mxu0
    %v1321 = vadd.f32 %v1121, %v1320
    %v1322 = vpop.f32.mrb[0].mxu0
    %v1323 = vpop.f32.mrb[0].mxu0
    %1324 = vdwg.mxu0
    %v1325 = vmax.f32 %v1319, 0.0
    %v1326 = vmax.f32 %v1321, 0.0
    %v1327 = vld [vmem:[#allocation8] sm:$0xff]
    %v1328 = vld [vmem:[#allocation8 + $0x8] sm:$0xff]
    %v1329 = vld [vmem:[#allocation8 + $0x10] sm:$0xff]
    %v1330 = vld [vmem:[#allocation8 + $0x18] sm:$0xff]
    %v1331 = vld [vmem:[#allocation8 + $0x20] sm:$0xff]
    %v1332 = vld [vmem:[#allocation8 + $0x28] sm:$0xff]
    %v1333 = vld [vmem:[#allocation8 + $0x30] sm:$0xff]
    %v1334 = vld [vmem:[#allocation8 + $0x38] sm:$0xff]
    %v1335 = vld [vmem:[#allocation8 + $0x40] sm:$0xff]
    %v1336 = vld [vmem:[#allocation8 + $0x48] sm:$0xff]
    %v1337 = vld [vmem:[#allocation8 + $0x50] sm:$0xff]
    %v1338 = vld [vmem:[#allocation8 + $0x58] sm:$0xff]
    %v1339 = vld [vmem:[#allocation8 + $0x60] sm:$0xff]
    %v1340 = vld [vmem:[#allocation8 + $0x68] sm:$0xff]
    %v1341 = vld [vmem:[#allocation8 + $0x70] sm:$0xff]
    %v1342 = vld [vmem:[#allocation8 + $0x78] sm:$0xff]
    %v1343 = vld [vmem:[#allocation8 + $0x80] sm:$0xff]
    %v1344 = vld [vmem:[#allocation8 + $0x88] sm:$0xff]
    %v1345 = vld [vmem:[#allocation8 + $0x90] sm:$0xff]
    %v1346 = vld [vmem:[#allocation8 + $0x98] sm:$0xff]
    %v1347 = vld [vmem:[#allocation8 + $0xa0] sm:$0xff]
    %v1348 = vld [vmem:[#allocation8 + $0xa8] sm:$0xff]
    %v1349 = vld [vmem:[#allocation8 + $0xb0] sm:$0xff]
    %v1350 = vld [vmem:[#allocation8 + $0xb8] sm:$0xff]
    %v1351 = vld [vmem:[#allocation8 + $0xc0] sm:$0xff]
    %v1352 = vld [vmem:[#allocation8 + $0xc8] sm:$0xff]
    %v1353 = vld [vmem:[#allocation8 + $0xd0] sm:$0xff]
    %v1354 = vld [vmem:[#allocation8 + $0xd8] sm:$0xff]
    %v1355 = vld [vmem:[#allocation8 + $0xe0] sm:$0xff]
    %v1356 = vld [vmem:[#allocation8 + $0xe8] sm:$0xff]
    %v1357 = vld [vmem:[#allocation8 + $0xf0] sm:$0xff]
    %v1358 = vld [vmem:[#allocation8 + $0xf8] sm:$0xff]
    %v1359 = vld [vmem:[%s6] sm:$0x3]
    %v1360 = vpack.c.bf16 %v1325, %v1325
    %v1361 = vpack.c.bf16 %v1326, %v1326
    %v1363 = vlaneseq
    %v1364 = vshrl.u32 %v1363, 7
    %v1365 = vsub.s32 0, %v1364
    %v1366 = vrot.slane %v1359, %v1365
    %v1367 = vlaneseq
    %v1368 = vshrl.u32 %v1367, 7
    %v1369 = vsub.s32 1, %v1368
    %v1370 = vrot.slane %v1359, %v1369
    %v1405 = vunpack.c.l.b16 %v1327
    %v1406 = vunpack.c.h.b16 %v1327
    %v1407 = vunpack.c.l.b16 %v1328
    %v1408 = vunpack.c.h.b16 %v1328
    %v1409 = vunpack.c.l.b16 %v1329
    %v1410 = vunpack.c.h.b16 %v1329
    %v1411 = vunpack.c.l.b16 %v1330
    %v1412 = vunpack.c.h.b16 %v1330
    %v1413 = vunpack.c.l.b16 %v1331
    %v1414 = vunpack.c.h.b16 %v1331
    %v1415 = vunpack.c.l.b16 %v1332
    %v1416 = vunpack.c.h.b16 %v1332
    %v1417 = vunpack.c.l.b16 %v1333
    %v1418 = vunpack.c.h.b16 %v1333
    %v1419 = vunpack.c.l.b16 %v1334
    %v1420 = vunpack.c.h.b16 %v1334
    %v1421 = vunpack.c.l.b16 %v1335
    %v1422 = vunpack.c.h.b16 %v1335
    %v1423 = vunpack.c.l.b16 %v1336
    %v1424 = vunpack.c.h.b16 %v1336
    %v1425 = vunpack.c.l.b16 %v1337
    %v1426 = vunpack.c.h.b16 %v1337
    %v1427 = vunpack.c.l.b16 %v1338
    %v1428 = vunpack.c.h.b16 %v1338
    %v1429 = vunpack.c.l.b16 %v1339
    %v1430 = vunpack.c.h.b16 %v1339
    %v1431 = vunpack.c.l.b16 %v1340
    %v1432 = vunpack.c.h.b16 %v1340
    %v1433 = vunpack.c.l.b16 %v1341
    %v1434 = vunpack.c.h.b16 %v1341
    %v1435 = vunpack.c.l.b16 %v1342
    %v1436 = vunpack.c.h.b16 %v1342
    %v1437 = vunpack.c.l.b16 %v1343
    %v1438 = vunpack.c.h.b16 %v1343
    %v1439 = vunpack.c.l.b16 %v1344
    %v1440 = vunpack.c.h.b16 %v1344
    %v1441 = vunpack.c.l.b16 %v1345
    %v1442 = vunpack.c.h.b16 %v1345
    %v1443 = vunpack.c.l.b16 %v1346
    %v1444 = vunpack.c.h.b16 %v1346
    %v1445 = vunpack.c.l.b16 %v1347
    %v1446 = vunpack.c.h.b16 %v1347
    %v1447 = vunpack.c.l.b16 %v1348
    %v1448 = vunpack.c.h.b16 %v1348
    %v1449 = vunpack.c.l.b16 %v1349
    %v1450 = vunpack.c.h.b16 %v1349
    %v1451 = vunpack.c.l.b16 %v1350
    %v1452 = vunpack.c.h.b16 %v1350
    %v1453 = vunpack.c.l.b16 %v1351
    %v1454 = vunpack.c.h.b16 %v1351
    %v1455 = vunpack.c.l.b16 %v1352
    %v1456 = vunpack.c.h.b16 %v1352
    %v1457 = vunpack.c.l.b16 %v1353
    %v1458 = vunpack.c.h.b16 %v1353
    %v1459 = vunpack.c.l.b16 %v1354
    %v1460 = vunpack.c.h.b16 %v1354
    %v1461 = vunpack.c.l.b16 %v1355
    %v1462 = vunpack.c.h.b16 %v1355
    %v1463 = vunpack.c.l.b16 %v1356
    %v1464 = vunpack.c.h.b16 %v1356
    %v1465 = vunpack.c.l.b16 %v1357
    %v1466 = vunpack.c.h.b16 %v1357
    %v1467 = vunpack.c.l.b16 %v1358
    %v1468 = vunpack.c.h.b16 %v1358
    %v1469 = vpack.c.b16 %v1407, %v1405
    %v1470 = vpack.c.b16 %v1408, %v1406
    %v1471 = vpack.c.b16 %v1411, %v1409
    %v1472 = vpack.c.b16 %v1412, %v1410
    %v1473 = vpack.c.b16 %v1415, %v1413
    %v1474 = vpack.c.b16 %v1416, %v1414
    %v1475 = vpack.c.b16 %v1419, %v1417
    %v1476 = vpack.c.b16 %v1420, %v1418
    %v1477 = vpack.c.b16 %v1423, %v1421
    %v1478 = vpack.c.b16 %v1424, %v1422
    %v1479 = vpack.c.b16 %v1427, %v1425
    %v1480 = vpack.c.b16 %v1428, %v1426
    %v1481 = vpack.c.b16 %v1431, %v1429
    %v1482 = vpack.c.b16 %v1432, %v1430
    %v1483 = vpack.c.b16 %v1435, %v1433
    %v1484 = vpack.c.b16 %v1436, %v1434
    %v1485 = vpack.c.b16 %v1439, %v1437
    %v1486 = vpack.c.b16 %v1440, %v1438
    %v1487 = vpack.c.b16 %v1443, %v1441
    %v1488 = vpack.c.b16 %v1444, %v1442
    %v1489 = vpack.c.b16 %v1447, %v1445
    %v1490 = vpack.c.b16 %v1448, %v1446
    %v1491 = vpack.c.b16 %v1451, %v1449
    %v1492 = vpack.c.b16 %v1452, %v1450
    %v1493 = vpack.c.b16 %v1455, %v1453
    %v1494 = vpack.c.b16 %v1456, %v1454
    %v1495 = vpack.c.b16 %v1459, %v1457
    %v1496 = vpack.c.b16 %v1460, %v1458
    %v1497 = vpack.c.b16 %v1463, %v1461
    %v1498 = vpack.c.b16 %v1464, %v1462
    %v1499 = vpack.c.b16 %v1467, %v1465
    %v1500 = vpack.c.b16 %v1468, %v1466
    %1533 = vmatprep.subr.bf16.mxu0 %v1470
    %1534 = vmatpush1.bf16.msra.mxu0 %v1469
    %1535 = vmatprep.subr.bf16.mxu0 %v1472
    %1536 = vmatpush1.bf16.msra.mxu0 %v1471
    %1537 = vmatprep.subr.bf16.mxu0 %v1474
    %1538 = vmatpush1.bf16.msra.mxu0 %v1473
    %1539 = vmatprep.subr.bf16.mxu0 %v1476
    %1540 = vmatpush1.bf16.msra.mxu0 %v1475
    %1541 = vmatprep.subr.bf16.mxu0 %v1478
    %1542 = vmatpush1.bf16.msra.mxu0 %v1477
    %1543 = vmatprep.subr.bf16.mxu0 %v1480
    %1544 = vmatpush1.bf16.msra.mxu0 %v1479
    %1545 = vmatprep.subr.bf16.mxu0 %v1482
    %1546 = vmatpush1.bf16.msra.mxu0 %v1481
    %1547 = vmatprep.subr.bf16.mxu0 %v1484
    %1548 = vmatpush1.bf16.msra.mxu0 %v1483
    %1549 = vmatprep.subr.bf16.mxu0 %v1486
    %1550 = vmatpush1.bf16.msra.mxu0 %v1485
    %1551 = vmatprep.subr.bf16.mxu0 %v1488
    %1552 = vmatpush1.bf16.msra.mxu0 %v1487
    %1553 = vmatprep.subr.bf16.mxu0 %v1490
    %1554 = vmatpush1.bf16.msra.mxu0 %v1489
    %1555 = vmatprep.subr.bf16.mxu0 %v1492
    %1556 = vmatpush1.bf16.msra.mxu0 %v1491
    %1557 = vmatprep.subr.bf16.mxu0 %v1494
    %1558 = vmatpush1.bf16.msra.mxu0 %v1493
    %1559 = vmatprep.subr.bf16.mxu0 %v1496
    %1560 = vmatpush1.bf16.msra.mxu0 %v1495
    %1561 = vmatprep.subr.bf16.mxu0 %v1498
    %1562 = vmatpush1.bf16.msra.mxu0 %v1497
    %1563 = vmatprep.subr.bf16.mxu0 %v1500
    %1564 = vmatpush1.bf16.msra.mxu0 %v1499
    %1565 = vmatprep.mubr.bf16.mxu0 %v1361
    %1566 = vmatmul.mubr.bf16.gmra.mrb[0].mxu0 %v1360
    %v1567 = vpop.f32.mrb[0].mxu0
    %v1568 = vadd.f32 %v1366, %v1567
    %v1569 = vpop.f32.mrb[0].mxu0
    %v1570 = vadd.f32 %v1370, %v1569
    %v1571 = vpop.f32.mrb[0].mxu0
    %v1572 = vpop.f32.mrb[0].mxu0
    %1573 = vdwg.mxu0
    %v1574 = vmax.f32 %v1568, 0.0
    %v1575 = vmax.f32 %v1570, 0.0
    %v1576 = vld [vmem:[#allocation10] sm:$0xf]
    %v1577 = vld [vmem:[#allocation10 + $0x4] sm:$0xf]
    %v1578 = vld [vmem:[#allocation10 + $0x8] sm:$0xf]
    %v1579 = vld [vmem:[#allocation10 + $0xc] sm:$0xf]
    %v1580 = vld [vmem:[#allocation10 + $0x10] sm:$0xf]
    %v1581 = vld [vmem:[#allocation10 + $0x14] sm:$0xf]
    %v1582 = vld [vmem:[#allocation10 + $0x18] sm:$0xf]
    %v1583 = vld [vmem:[#allocation10 + $0x1c] sm:$0xf]
    %v1584 = vld [vmem:[#allocation10 + $0x20] sm:$0xf]
    %v1585 = vld [vmem:[#allocation10 + $0x24] sm:$0xf]
    %v1586 = vld [vmem:[#allocation10 + $0x28] sm:$0xf]
    %v1587 = vld [vmem:[#allocation10 + $0x2c] sm:$0xf]
    %v1588 = vld [vmem:[#allocation10 + $0x30] sm:$0xf]
    %v1589 = vld [vmem:[#allocation10 + $0x34] sm:$0xf]
    %v1590 = vld [vmem:[#allocation10 + $0x38] sm:$0xf]
    %v1591 = vld [vmem:[#allocation10 + $0x3c] sm:$0xf]
    %v1592 = vld [vmem:[#allocation10 + $0x40] sm:$0xf]
    %v1593 = vld [vmem:[#allocation10 + $0x44] sm:$0xf]
    %v1594 = vld [vmem:[#allocation10 + $0x48] sm:$0xf]
    %v1595 = vld [vmem:[#allocation10 + $0x4c] sm:$0xf]
    %v1596 = vld [vmem:[#allocation10 + $0x50] sm:$0xf]
    %v1597 = vld [vmem:[#allocation10 + $0x54] sm:$0xf]
    %v1598 = vld [vmem:[#allocation10 + $0x58] sm:$0xf]
    %v1599 = vld [vmem:[#allocation10 + $0x5c] sm:$0xf]
    %v1600 = vld [vmem:[#allocation10 + $0x60] sm:$0xf]
    %v1601 = vld [vmem:[#allocation10 + $0x64] sm:$0xf]
    %v1602 = vld [vmem:[#allocation10 + $0x68] sm:$0xf]
    %v1603 = vld [vmem:[#allocation10 + $0x6c] sm:$0xf]
    %v1604 = vld [vmem:[#allocation10 + $0x70] sm:$0xf]
    %v1605 = vld [vmem:[#allocation10 + $0x74] sm:$0xf]
    %v1606 = vld [vmem:[#allocation10 + $0x78] sm:$0xf]
    %v1607 = vld [vmem:[#allocation10 + $0x7c] sm:$0xf]
    %v1608 = vld [vmem:[%s8] sm:$0x1]
    %v1609 = vpack.c.bf16 %v1574, %v1574
    %v1610 = vpack.c.bf16 %v1575, %v1575
    %v1612 = vlaneseq
    %v1613 = vshrl.u32 %v1612, 7
    %v1614 = vsub.s32 0, %v1613
    %v1615 = vrot.slane %v1608, %v1614
    %v1649 = vunpack.c.l.b16 %v1576
    %v1650 = vunpack.c.l.b16 %v1577
    %v1651 = vunpack.c.l.b16 %v1578
    %v1652 = vunpack.c.l.b16 %v1579
    %v1653 = vunpack.c.l.b16 %v1580
    %v1654 = vunpack.c.l.b16 %v1581
    %v1655 = vunpack.c.l.b16 %v1582
    %v1656 = vunpack.c.l.b16 %v1583
    %v1657 = vunpack.c.l.b16 %v1584
    %v1658 = vunpack.c.l.b16 %v1585
    %v1659 = vunpack.c.l.b16 %v1586
    %v1660 = vunpack.c.l.b16 %v1587
    %v1661 = vunpack.c.l.b16 %v1588
    %v1662 = vunpack.c.l.b16 %v1589
    %v1663 = vunpack.c.l.b16 %v1590
    %v1664 = vunpack.c.l.b16 %v1591
    %v1665 = vunpack.c.l.b16 %v1592
    %v1666 = vunpack.c.l.b16 %v1593
    %v1667 = vunpack.c.l.b16 %v1594
    %v1668 = vunpack.c.l.b16 %v1595
    %v1669 = vunpack.c.l.b16 %v1596
    %v1670 = vunpack.c.l.b16 %v1597
    %v1671 = vunpack.c.l.b16 %v1598
    %v1672 = vunpack.c.l.b16 %v1599
    %v1673 = vunpack.c.l.b16 %v1600
    %v1674 = vunpack.c.l.b16 %v1601
    %v1675 = vunpack.c.l.b16 %v1602
    %v1676 = vunpack.c.l.b16 %v1603
    %v1677 = vunpack.c.l.b16 %v1604
    %v1678 = vunpack.c.l.b16 %v1605
    %v1679 = vunpack.c.l.b16 %v1606
    %v1680 = vunpack.c.l.b16 %v1607
    %v1681 = vpack.c.b16 %v1650, %v1649
    %v1682 = vpack.c.b16 %v1652, %v1651
    %v1683 = vpack.c.b16 %v1654, %v1653
    %v1684 = vpack.c.b16 %v1656, %v1655
    %v1685 = vpack.c.b16 %v1658, %v1657
    %v1686 = vpack.c.b16 %v1660, %v1659
    %v1687 = vpack.c.b16 %v1662, %v1661
    %v1688 = vpack.c.b16 %v1664, %v1663
    %v1689 = vpack.c.b16 %v1666, %v1665
    %v1690 = vpack.c.b16 %v1668, %v1667
    %v1691 = vpack.c.b16 %v1670, %v1669
    %v1692 = vpack.c.b16 %v1672, %v1671
    %v1693 = vpack.c.b16 %v1674, %v1673
    %v1694 = vpack.c.b16 %v1676, %v1675
    %v1695 = vpack.c.b16 %v1678, %v1677
    %v1696 = vpack.c.b16 %v1680, %v1679
    %1713 = vmatprep.subr.bf16.mxu0 0
    %1714 = vmatpush1.bf16.msra.mxu0 %v1681
    %1715 = vmatprep.subr.bf16.mxu0 0
    %1716 = vmatpush1.bf16.msra.mxu0 %v1682
    %1717 = vmatprep.subr.bf16.mxu0 0
    %1718 = vmatpush1.bf16.msra.mxu0 %v1683
    %1719 = vmatprep.subr.bf16.mxu0 0
    %1720 = vmatpush1.bf16.msra.mxu0 %v1684
    %1721 = vmatprep.subr.bf16.mxu0 0
    %1722 = vmatpush1.bf16.msra.mxu0 %v1685
    %1723 = vmatprep.subr.bf16.mxu0 0
    %1724 = vmatpush1.bf16.msra.mxu0 %v1686
    %1725 = vmatprep.subr.bf16.mxu0 0
    %1726 = vmatpush1.bf16.msra.mxu0 %v1687
    %1727 = vmatprep.subr.bf16.mxu0 0
    %1728 = vmatpush1.bf16.msra.mxu0 %v1688
    %1729 = vmatprep.subr.bf16.mxu0 0
    %1730 = vmatpush1.bf16.msra.mxu0 %v1689
    %1731 = vmatprep.subr.bf16.mxu0 0
    %1732 = vmatpush1.bf16.msra.mxu0 %v1690
    %1733 = vmatprep.subr.bf16.mxu0 0
    %1734 = vmatpush1.bf16.msra.mxu0 %v1691
    %1735 = vmatprep.subr.bf16.mxu0 0
    %1736 = vmatpush1.bf16.msra.mxu0 %v1692
    %1737 = vmatprep.subr.bf16.mxu0 0
    %1738 = vmatpush1.bf16.msra.mxu0 %v1693
    %1739 = vmatprep.subr.bf16.mxu0 0
    %1740 = vmatpush1.bf16.msra.mxu0 %v1694
    %1741 = vmatprep.subr.bf16.mxu0 0
    %1742 = vmatpush1.bf16.msra.mxu0 %v1695
    %1743 = vmatprep.subr.bf16.mxu0 0
    %1744 = vmatpush1.bf16.msra.mxu0 %v1696
    %1745 = vmatprep.mubr.bf16.mxu0 %v1610
    %1746 = vmatmul.mubr.bf16.gmra.mrb[0].mxu0 %v1609
    %v1747 = vpop.f32.mrb[0].mxu0
    %v1748 = vadd.f32 %v1615, %v1747
    %v1749 = vpop.f32.mrb[0].mxu0
    %v1750 = vpop.f32.mrb[0].mxu0
    %v1751 = vpop.f32.mrb[0].mxu0
    %1752 = vdwg.mxu0
    %1753 = vst [vmem:[#allocation11] sm:$0xff] %v1748
    // Predicated region
    $region58: #{tpu_custom_call.1} parent=1 // pred_check
      _
    $region59: #{tpu_custom_call.1} parent=1 // pred_check_branch
      %1755 = sbr.rel (0) target = $region61
    $region60: #{tpu_custom_call.1} parent=1 // pred_region
      %s1757 = ssub.s32 128, 128
      %1758 = vsyncadd [#allocation4], %s1757
      %s1760 = sshll.u32 [#allocation11], 4
      %s1761 = int_to_ptr.vmem [resolvable:$true] %s1760
      %1763 = dma.vmem_to_hbm [thread:$0]  %s1761, 128, %s9, [#allocation4]
    $region61: #{tpu_custom_call.1} parent=1 // pred_fallthru
      _
    // Predicated region
    $region62: #{tpu_custom_call.1} parent=1 // pred_check
      _
    $region63: #{tpu_custom_call.1} parent=1 // pred_check_branch
      %1765 = sbr.rel (0) target = $region65
    $region64: #{tpu_custom_call.1} parent=1 // pred_region
      %1766 = dma.done [#allocation4], 128
    $region65: #{tpu_custom_call.1} parent=1 // pred_fallthru
      _
    %1767 = vsyncpa [#allocation3], 1
    %1768 = vsyncpa [#allocation6], 1
    %1769 = vsyncpa [#allocation9], 1
    %1770 = vsyncpa [#allocation4], 1

</llo_original>
